<compile_context>
chip_gen: v6e
topology: v6e:2x2x1
jax: 0.10.0
libtpu: 0.0.40
codegen_flags: <defaults>
</compile_context>

<pallas_src>
import jax
import jax.numpy as jnp
import numpy as np
from jax.experimental import pallas as pl
from jax.experimental.pallas import tpu as pltpu

HIDDEN_DIM = 256            # original script uses 1024; reduced for a small runnable example
NUM_LAYERS = 5
DROPOUT = 0.1               # > 0 so Dropout modules exist (identity at inference)
OUTPUT_SIZE = HIDDEN_DIM    # literal Sequential is only runnable with output_size == hidden_dim
BATCH = 200                 # pads into a single 256-row tile
TILE_B = 256


# ----------------------------------------------------------------------------
# Reconstruct the exact module sequence produced by nn.Sequential / add_module.
# ----------------------------------------------------------------------------
def build_sequence(num_layers, dropout):
    """Mimics add_module: dict re-assignment keeps original key position."""
    modules = {}
    for i in range(num_layers):
        if dropout > 0:
            modules[f"p-dropout-{i}"] = ("dropout", None)
        modules[f"p-linear-{i}"] = ("linear", f"p-linear-{i}")
        modules[f"p-relu-{i}"] = ("relu", None)
        # same key every iteration -> replaced in place, keeps position after p-relu-0
        modules["p-linear-final"] = ("linear", "p-linear-final")
    return list(modules.values())


def derive_linear_plan(seq):
    """Collapse the sequence into (linear_name, relu_follows) pairs (dropout = identity)."""
    plan = []
    n = len(seq)
    for idx, (kind, name) in enumerate(seq):
        if kind != "linear":
            continue
        j = idx + 1
        while j < n and seq[j][0] == "dropout":
            j += 1
        plan.append((name, j < n and seq[j][0] == "relu"))
    return plan


SEQ = build_sequence(NUM_LAYERS, DROPOUT)
PLAN = derive_linear_plan(SEQ)              # 6 linears; relu flags: [T, F, T, T, T, T]
NUM_LINEARS = len(PLAN)
RELU_FLAGS = tuple(bool(r) for _, r in PLAN)


# ----------------------------------------------------------------------------
# Pallas kernel: single grid axis over batch tiles; the full weight/bias stacks
# are VMEM-resident (constant index_map) and the 6-layer MLP is an unrolled
# Python loop, so each layer is a static bf16 x bf16 -> f32 MXU matmul plus an
# f32 bias add and (statically selected) ReLU.
# ----------------------------------------------------------------------------
def mlp_kernel(x_ref, w_ref, b_ref, o_ref):
    # x_ref: (TILE_B, H) f32   w_ref: (L, H, H) bf16   b_ref: (L, 1, H) f32
    h_bf16 = x_ref[...].astype(jnp.bfloat16)
    h_f32 = None
    for l, relu in enumerate(RELU_FLAGS):
        h_f32 = jnp.dot(h_bf16, w_ref[l],
                        preferred_element_type=jnp.float32) + b_ref[l]
        if relu:
            h_f32 = jnp.maximum(h_f32, 0.0)
        if l + 1 < NUM_LINEARS:
            h_bf16 = h_f32.astype(jnp.bfloat16)   # MXU input for next layer
    o_ref[...] = h_f32.astype(o_ref.dtype)


def attack_type_classifier_forward(x, w_stack, b_stack, *, tile_b=TILE_B):
    B, H = x.shape
    L, H_in, H_out = w_stack.shape
    assert H_in == H and H_out == H, \
        "literal AttackTypeClassifier graph requires output_size == hidden_dim"
    assert H % 128 == 0, "feature dim must be lane-aligned (multiple of 128)"

    b_pad = pl.cdiv(B, tile_b) * tile_b
    if b_pad != B:
        x = jnp.pad(x, ((0, b_pad - B), (0, 0)))      # zero rows -> sliced off below

    # Resident-weight VMEM budget: raise the scoped limit only if actually needed
    # (e.g. HIDDEN_DIM=1024 on v5e's 16 MiB default).  Leave headroom, stay under
    # v7x's 64 MiB physical VMEM.
    weight_bytes = L * H * H * 2                       # bf16 weights, single-buffered
    bias_bytes = L * H * 4
    act_bytes = 2 * 2 * tile_b * H * 4                 # x + out, double-buffered, f32
    vmem_needed = weight_bytes + bias_bytes + act_bytes + (2 << 20)
    vmem_limit = None if vmem_needed <= (16 << 20) else min(vmem_needed + (4 << 20), 60 << 20)

    out = pl.pallas_call(
        mlp_kernel,
        out_shape=jax.ShapeDtypeStruct((b_pad, H), x.dtype),
        grid_spec=pltpu.PrefetchScalarGridSpec(
            num_scalar_prefetch=0,
            grid=(b_pad // tile_b,),
            in_specs=[
                # per-tile activations
                pl.BlockSpec((tile_b, H), lambda i: (i, 0)),
                # full weight stack, resident across all batch tiles
                pl.BlockSpec((L, H, H), lambda i: (0, 0, 0)),
                # full bias slab, resident across all batch tiles
                pl.BlockSpec((L, 1, H), lambda i: (0, 0, 0)),
            ],
            out_specs=pl.BlockSpec((tile_b, H), lambda i: (i, 0)),
        ),
        compiler_params=pltpu.CompilerParams(
            # "arbitrary": never shard a small batch across the two v7x cores
            # (that would duplicate the resident weight DMA on a mem-bound op).
            dimension_semantics=("arbitrary",),
            vmem_limit_bytes=vmem_limit,
        ),
    )(x, w_stack, b_stack)
    return out[:B]


# ----------------------------------------------------------------------------
# Deterministic parameter init (PyTorch Linear default: U(-1/sqrt(fan_in), +1/sqrt(fan_in)))
# ----------------------------------------------------------------------------
def init_params(key):
    params = {}
    names = sorted({name for name, _ in PLAN})
    keys = jax.random.split(key, 2 * len(names))
    bound = 1.0 / np.sqrt(HIDDEN_DIM)
    for idx, name in enumerate(names):
        out_dim = OUTPUT_SIZE if name == "p-linear-final" else HIDDEN_DIM
        W = jax.random.uniform(keys[2 * idx], (out_dim, HIDDEN_DIM),
                               jnp.float32, -bound, bound)     # PyTorch [out, in]
        b = jax.random.uniform(keys[2 * idx + 1], (out_dim,),
                               jnp.float32, -bound, bound)
        params[name] = (W, b)
    return params


def stack_params(params):
    # Stack in execution order; pre-transpose to [in, out] and cast to bf16 so
    # the kernel does h @ W on native MXU input dtype.  Biases stay f32.
    assert OUTPUT_SIZE == HIDDEN_DIM, \
        "literal AttackTypeClassifier graph requires output_size == hidden_dim"
    w_stack = jnp.stack([params[name][0].T for name, _ in PLAN],
                        axis=0).astype(jnp.bfloat16)            # (L, H, H) bf16
    b_stack = jnp.stack([params[name][1] for name, _ in PLAN],
                        axis=0)[:, None, :]                     # (L, 1, H) f32
    return w_stack, b_stack


def reference_forward(x, params):
    """Plain-JAX reference implementing the same math (bf16 MXU inputs, f32 accumulate)."""
    h = x.astype(jnp.float32)
    for name, relu in PLAN:
        W, b = params[name]
        h = jnp.dot(h.astype(jnp.bfloat16), W.astype(jnp.bfloat16).T,
                    preferred_element_type=jnp.float32) + b
        if relu:
            h = jnp.maximum(h, 0.0)
    return h


if __name__ == "__main__":
    key = jax.random.PRNGKey(0)
    kx, kp = jax.random.split(key)
    x = jax.random.normal(kx, (BATCH, HIDDEN_DIM), jnp.float32)

    params = init_params(kp)
    w_stack, b_stack = stack_params(params)   # (6, 256, 256) bf16, (6, 1, 256) f32

    out = attack_type_classifier_forward(x, w_stack, b_stack)
    out = jax.block_until_ready(out)

    ref = jax.block_until_ready(reference_forward(x, params))
    assert out.shape == (BATCH, OUTPUT_SIZE)
    assert np.allclose(np.asarray(out), np.asarray(ref), atol=2e-2, rtol=2e-2), \
        "Pallas kernel output does not match JAX reference"

    print("KERNEL_OK")
</pallas_src>

<mosaic_0001>
module attributes {stable_mosaic.version = 11 : i64} {
  func.func @mlp_kernel(%arg0: i32, %arg1: memref<256x256xf32, #tpu.memory_space<vmem>>, %arg2: memref<6x256x256xbf16, #tpu.memory_space<vmem>>, %arg3: memref<6x1x256xf32, #tpu.memory_space<vmem>>, %arg4: memref<256x256xf32, #tpu.memory_space<vmem>>) attributes {dimension_semantics = [#tpu.dimension_semantics<arbitrary>], iteration_bounds = array<i64: 1>, scalar_prefetch = 0 : i64, scratch_operands = 0 : i64, tpu.core_type = #tpu.core_type<tc>, window_params = [{transform_indices = @transform_0, window_bounds = array<i64: 256, 256>}, {pipeline_mode = #tpu.pipeline_mode<synchronous>, transform_indices = @transform_1, window_bounds = array<i64: 6, 256, 256>}, {pipeline_mode = #tpu.pipeline_mode<synchronous>, transform_indices = @transform_2, window_bounds = array<i64: 6, 1, 256>}, {transform_indices = @transform_3, window_bounds = array<i64: 256, 256>}]} {
    %c0 = arith.constant 0 : index
    %c0_0 = arith.constant 0 : index
    %0 = vector.load %arg1[%c0, %c0_0] : memref<256x256xf32, #tpu.memory_space<vmem>>, vector<256x256xf32>
    %1 = arith.truncf %0 : vector<256x256xf32> to vector<256x256xbf16>
    %c0_1 = arith.constant 0 : index
    %c0_2 = arith.constant 0 : index
    %c0_3 = arith.constant 0 : index
    %2 = vector.load %arg2[%c0_1, %c0_2, %c0_3] : memref<6x256x256xbf16, #tpu.memory_space<vmem>>, vector<1x256x256xbf16>
    %3 = vector.shape_cast %2 : vector<1x256x256xbf16> to vector<256x256xbf16>
    %cst = arith.constant dense<0.000000e+00> : vector<256x256xf32>
    %4 = tpu.matmul %1, %3, %cst {dimension_numbers = #tpu.dot_dimension_numbers<[1], [0], [0], [1], [0, 0, 1, 1], [], []>} : vector<256x256xbf16>, vector<256x256xbf16>, vector<256x256xf32> -> vector<256x256xf32>
    %c0_4 = arith.constant 0 : index
    %c0_5 = arith.constant 0 : index
    %c0_6 = arith.constant 0 : index
    %5 = vector.load %arg3[%c0_4, %c0_5, %c0_6] : memref<6x1x256xf32, #tpu.memory_space<vmem>>, vector<1x1x256xf32>
    %6 = vector.shape_cast %5 : vector<1x1x256xf32> to vector<1x256xf32>
    %7 = vector.broadcast %6 : vector<1x256xf32> to vector<256x256xf32>
    %8 = arith.addf %4, %7 : vector<256x256xf32>
    %cst_7 = arith.constant 0.000000e+00 : f32
    %9 = vector.broadcast %cst_7 : f32 to vector<256x256xf32>
    %10 = arith.maximumf %8, %9 : vector<256x256xf32>
    %11 = arith.truncf %10 : vector<256x256xf32> to vector<256x256xbf16>
    %c1 = arith.constant 1 : index
    %c0_8 = arith.constant 0 : index
    %c0_9 = arith.constant 0 : index
    %12 = vector.load %arg2[%c1, %c0_8, %c0_9] : memref<6x256x256xbf16, #tpu.memory_space<vmem>>, vector<1x256x256xbf16>
    %13 = vector.shape_cast %12 : vector<1x256x256xbf16> to vector<256x256xbf16>
    %cst_10 = arith.constant dense<0.000000e+00> : vector<256x256xf32>
    %14 = tpu.matmul %11, %13, %cst_10 {dimension_numbers = #tpu.dot_dimension_numbers<[1], [0], [0], [1], [0, 0, 1, 1], [], []>} : vector<256x256xbf16>, vector<256x256xbf16>, vector<256x256xf32> -> vector<256x256xf32>
    %c1_11 = arith.constant 1 : index
    %c0_12 = arith.constant 0 : index
    %c0_13 = arith.constant 0 : index
    %15 = vector.load %arg3[%c1_11, %c0_12, %c0_13] : memref<6x1x256xf32, #tpu.memory_space<vmem>>, vector<1x1x256xf32>
    %16 = vector.shape_cast %15 : vector<1x1x256xf32> to vector<1x256xf32>
    %17 = vector.broadcast %16 : vector<1x256xf32> to vector<256x256xf32>
    %18 = arith.addf %14, %17 : vector<256x256xf32>
    %19 = arith.truncf %18 : vector<256x256xf32> to vector<256x256xbf16>
    %c2 = arith.constant 2 : index
    %c0_14 = arith.constant 0 : index
    %c0_15 = arith.constant 0 : index
    %20 = vector.load %arg2[%c2, %c0_14, %c0_15] : memref<6x256x256xbf16, #tpu.memory_space<vmem>>, vector<1x256x256xbf16>
    %21 = vector.shape_cast %20 : vector<1x256x256xbf16> to vector<256x256xbf16>
    %cst_16 = arith.constant dense<0.000000e+00> : vector<256x256xf32>
    %22 = tpu.matmul %19, %21, %cst_16 {dimension_numbers = #tpu.dot_dimension_numbers<[1], [0], [0], [1], [0, 0, 1, 1], [], []>} : vector<256x256xbf16>, vector<256x256xbf16>, vector<256x256xf32> -> vector<256x256xf32>
    %c2_17 = arith.constant 2 : index
    %c0_18 = arith.constant 0 : index
    %c0_19 = arith.constant 0 : index
    %23 = vector.load %arg3[%c2_17, %c0_18, %c0_19] : memref<6x1x256xf32, #tpu.memory_space<vmem>>, vector<1x1x256xf32>
    %24 = vector.shape_cast %23 : vector<1x1x256xf32> to vector<1x256xf32>
    %25 = vector.broadcast %24 : vector<1x256xf32> to vector<256x256xf32>
    %26 = arith.addf %22, %25 : vector<256x256xf32>
    %cst_20 = arith.constant 0.000000e+00 : f32
    %27 = vector.broadcast %cst_20 : f32 to vector<256x256xf32>
    %28 = arith.maximumf %26, %27 : vector<256x256xf32>
    %29 = arith.truncf %28 : vector<256x256xf32> to vector<256x256xbf16>
    %c3 = arith.constant 3 : index
    %c0_21 = arith.constant 0 : index
    %c0_22 = arith.constant 0 : index
    %30 = vector.load %arg2[%c3, %c0_21, %c0_22] : memref<6x256x256xbf16, #tpu.memory_space<vmem>>, vector<1x256x256xbf16>
    %31 = vector.shape_cast %30 : vector<1x256x256xbf16> to vector<256x256xbf16>
    %cst_23 = arith.constant dense<0.000000e+00> : vector<256x256xf32>
    %32 = tpu.matmul %29, %31, %cst_23 {dimension_numbers = #tpu.dot_dimension_numbers<[1], [0], [0], [1], [0, 0, 1, 1], [], []>} : vector<256x256xbf16>, vector<256x256xbf16>, vector<256x256xf32> -> vector<256x256xf32>
    %c3_24 = arith.constant 3 : index
    %c0_25 = arith.constant 0 : index
    %c0_26 = arith.constant 0 : index
    %33 = vector.load %arg3[%c3_24, %c0_25, %c0_26] : memref<6x1x256xf32, #tpu.memory_space<vmem>>, vector<1x1x256xf32>
    %34 = vector.shape_cast %33 : vector<1x1x256xf32> to vector<1x256xf32>
    %35 = vector.broadcast %34 : vector<1x256xf32> to vector<256x256xf32>
    %36 = arith.addf %32, %35 : vector<256x256xf32>
    %cst_27 = arith.constant 0.000000e+00 : f32
    %37 = vector.broadcast %cst_27 : f32 to vector<256x256xf32>
    %38 = arith.maximumf %36, %37 : vector<256x256xf32>
    %39 = arith.truncf %38 : vector<256x256xf32> to vector<256x256xbf16>
    %c4 = arith.constant 4 : index
    %c0_28 = arith.constant 0 : index
    %c0_29 = arith.constant 0 : index
    %40 = vector.load %arg2[%c4, %c0_28, %c0_29] : memref<6x256x256xbf16, #tpu.memory_space<vmem>>, vector<1x256x256xbf16>
    %41 = vector.shape_cast %40 : vector<1x256x256xbf16> to vector<256x256xbf16>
    %cst_30 = arith.constant dense<0.000000e+00> : vector<256x256xf32>
    %42 = tpu.matmul %39, %41, %cst_30 {dimension_numbers = #tpu.dot_dimension_numbers<[1], [0], [0], [1], [0, 0, 1, 1], [], []>} : vector<256x256xbf16>, vector<256x256xbf16>, vector<256x256xf32> -> vector<256x256xf32>
    %c4_31 = arith.constant 4 : index
    %c0_32 = arith.constant 0 : index
    %c0_33 = arith.constant 0 : index
    %43 = vector.load %arg3[%c4_31, %c0_32, %c0_33] : memref<6x1x256xf32, #tpu.memory_space<vmem>>, vector<1x1x256xf32>
    %44 = vector.shape_cast %43 : vector<1x1x256xf32> to vector<1x256xf32>
    %45 = vector.broadcast %44 : vector<1x256xf32> to vector<256x256xf32>
    %46 = arith.addf %42, %45 : vector<256x256xf32>
    %cst_34 = arith.constant 0.000000e+00 : f32
    %47 = vector.broadcast %cst_34 : f32 to vector<256x256xf32>
    %48 = arith.maximumf %46, %47 : vector<256x256xf32>
    %49 = arith.truncf %48 : vector<256x256xf32> to vector<256x256xbf16>
    %c5 = arith.constant 5 : index
    %c0_35 = arith.constant 0 : index
    %c0_36 = arith.constant 0 : index
    %50 = vector.load %arg2[%c5, %c0_35, %c0_36] : memref<6x256x256xbf16, #tpu.memory_space<vmem>>, vector<1x256x256xbf16>
    %51 = vector.shape_cast %50 : vector<1x256x256xbf16> to vector<256x256xbf16>
    %cst_37 = arith.constant dense<0.000000e+00> : vector<256x256xf32>
    %52 = tpu.matmul %49, %51, %cst_37 {dimension_numbers = #tpu.dot_dimension_numbers<[1], [0], [0], [1], [0, 0, 1, 1], [], []>} : vector<256x256xbf16>, vector<256x256xbf16>, vector<256x256xf32> -> vector<256x256xf32>
    %c5_38 = arith.constant 5 : index
    %c0_39 = arith.constant 0 : index
    %c0_40 = arith.constant 0 : index
    %53 = vector.load %arg3[%c5_38, %c0_39, %c0_40] : memref<6x1x256xf32, #tpu.memory_space<vmem>>, vector<1x1x256xf32>
    %54 = vector.shape_cast %53 : vector<1x1x256xf32> to vector<1x256xf32>
    %55 = vector.broadcast %54 : vector<1x256xf32> to vector<256x256xf32>
    %56 = arith.addf %52, %55 : vector<256x256xf32>
    %cst_41 = arith.constant 0.000000e+00 : f32
    %57 = vector.broadcast %cst_41 : f32 to vector<256x256xf32>
    %58 = arith.maximumf %56, %57 : vector<256x256xf32>
    %c0_42 = arith.constant 0 : index
    %c0_43 = arith.constant 0 : index
    %59 = vector.load %arg4[%c0_42, %c0_43] : memref<256x256xf32, #tpu.memory_space<vmem>>, vector<256x256xf32>
    tpu.vector_store %arg4[%c0_42, %c0_43], %58 {strides = array<i32>} : memref<256x256xf32, #tpu.memory_space<vmem>>, vector<256x256xf32>,
    return
  }
  func.func @transform_0(%arg0: i32) -> (i32, i32) {
    %c0_i32 = arith.constant 0 : i32
    %c0_i32_0 = arith.constant 0 : i32
    return %arg0, %c0_i32 : i32, i32
  }
  func.func @transform_1(%arg0: i32) -> (i32, i32, i32) {
    %c0_i32 = arith.constant 0 : i32
    %c0_i32_0 = arith.constant 0 : i32
    %c0_i32_1 = arith.constant 0 : i32
    %c0_i32_2 = arith.constant 0 : i32
    return %c0_i32, %c0_i32_0, %c0_i32_1 : i32, i32, i32
  }
  func.func @transform_2(%arg0: i32) -> (i32, i32, i32) {
    %c0_i32 = arith.constant 0 : i32
    %c0_i32_0 = arith.constant 0 : i32
    %c0_i32_1 = arith.constant 0 : i32
    %c0_i32_2 = arith.constant 0 : i32
    return %c0_i32, %c0_i32_0, %c0_i32_1 : i32, i32, i32
  }
  func.func @transform_3(%arg0: i32) -> (i32, i32) {
    %c0_i32 = arith.constant 0 : i32
    %c0_i32_0 = arith.constant 0 : i32
    return %arg0, %c0_i32 : i32, i32
  }
}

</mosaic_0001>

<llo_original>
// kernel: tpu_custom_call.1
$region0: #{tpu_custom_call.1}
  #allocation0 [shape = 'u32[]', space=smem, size = 0x4, offset = 0x4, fixed_abs, tag = 'smem constant byte address 0x4 - core index']
  #allocation1 [shape = 'u32[144,128]{1,0:T(1,128)}', space=vmem, size = 0x12000, scoped, tag = 'internal scratch']
  %s0 = inlined_call_operand.hbm [shape: f32[256,256], index: 0, kind: input, shape index: {}]
  %s1 = inlined_call_operand.hbm [shape: bf16[6,256,256], index: 1, kind: input, shape index: {}]
  %s2 = inlined_call_operand.hbm [shape: f32[6,1,256], index: 2, kind: input, shape index: {}]
  %s3 = inlined_call_operand.hbm [shape: f32[256,256], index: 3, kind: output, shape index: {}]
  %s4 = sld [smem:[#allocation0]]
  $region34: #{tpu_custom_call.1} parent=0
    _
  %s6 = ssub.s32 1, %s4
  %s7 = scalar_select 0, %s6, %s4
  $region1: #{tpu_custom_call.1} parent=0
    #allocation2 [shape = 'u8[262144]{0}', space=vmem, size = 0x40000, scoped, tag = 'input window, operand 0, single buffered']
    #allocation3 [shape = 's32[1]{0}', space=sflag, size = 0x4, scoped, tag = 'scoped memory for tpu_custom_call.1']
    #allocation4 [shape = 's32[1]{0}', space=sflag, size = 0x4, scoped, tag = 'scoped memory for tpu_custom_call.1']
    #allocation5 [shape = 'u8[786432]{0}', space=vmem, size = 0xc0000, scoped, tag = 'input window, operand 1, single buffered']
    #allocation6 [shape = 's32[1]{0}', space=sflag, size = 0x4, scoped, tag = 'scoped memory for tpu_custom_call.1']
    #allocation7 [shape = 'u8[6144]{0}', space=vmem, size = 0x1800, scoped, tag = 'input window, operand 2, single buffered']
    #allocation8 [shape = 'u8[262144]{0}', space=vmem, size = 0x40000, scoped, tag = 'output window, operand 0, single buffered']
    %8 = vsyncpa [#allocation3], 0
    %9 = vsyncpa [#allocation6], 0
    %10 = vsyncpa [#allocation4], 0
    // Predicated region
    $region2: #{tpu_custom_call.1} parent=1 // pred_check
      _
    $region3: #{tpu_custom_call.1} parent=1 // pred_check_branch
      %12 = sbr.rel (0) target = $region5
    $region4: #{tpu_custom_call.1} parent=1 // pred_region
      %s14 = ssub.s32 8192, 8192
      %15 = vsyncadd [#allocation3], %s14
      %s16 = sshll.u32 [#allocation2], 4
      %s17 = int_to_ptr.vmem [resolvable:$true] %s16
      %22 = dma.hbm_to_vmem [thread:$0]  %s0, 8192, %s17, [#allocation3], 256, 256, 16
    $region5: #{tpu_custom_call.1} parent=1 // pred_fallthru
      _
    // Predicated region
    $region6: #{tpu_custom_call.1} parent=1 // pred_check
      _
    $region7: #{tpu_custom_call.1} parent=1 // pred_check_branch
      %24 = sbr.rel (0) target = $region9
    $region8: #{tpu_custom_call.1} parent=1 // pred_region
      %s26 = ssub.s32 24576, 24576
      %27 = vsyncadd [#allocation6], %s26
      %s28 = sshll.u32 [#allocation5], 4
      %s29 = int_to_ptr.vmem [resolvable:$true] %s28
      %34 = dma.hbm_to_vmem [thread:$0]  %s1, 24576, %s29, [#allocation6], 128, 128, 8
    $region9: #{tpu_custom_call.1} parent=1 // pred_fallthru
      _
    // Predicated region
    $region10: #{tpu_custom_call.1} parent=1 // pred_check
      _
    $region11: #{tpu_custom_call.1} parent=1 // pred_check_branch
      %36 = sbr.rel (0) target = $region13
    $region12: #{tpu_custom_call.1} parent=1 // pred_region
      %s38 = ssub.s32 192, 192
      %39 = vsyncadd [#allocation6], %s38
      %s40 = sshll.u32 [#allocation7], 4
      %s41 = int_to_ptr.vmem [resolvable:$true] %s40
      %46 = dma.hbm_to_vmem [thread:$0]  %s2, 192, %s41, [#allocation6], 32, 32, 2
    $region13: #{tpu_custom_call.1} parent=1 // pred_fallthru
      _
    // Predicated region
    $region14: #{tpu_custom_call.1} parent=1 // pred_check
      _
    $region15: #{tpu_custom_call.1} parent=1 // pred_check_branch
      %48 = sbr.rel (0) target = $region17
    $region16: #{tpu_custom_call.1} parent=1 // pred_region
      %49 = dma.done [#allocation3], 8192
    $region17: #{tpu_custom_call.1} parent=1 // pred_fallthru
      _
    // Predicated region
    $region18: #{tpu_custom_call.1} parent=1 // pred_check
      _
    $region19: #{tpu_custom_call.1} parent=1 // pred_check_branch
      %51 = sbr.rel (0) target = $region21
    $region20: #{tpu_custom_call.1} parent=1 // pred_region
      %52 = dma.done [#allocation6], 24576
    $region21: #{tpu_custom_call.1} parent=1 // pred_fallthru
      _
    // Predicated region
    $region22: #{tpu_custom_call.1} parent=1 // pred_check
      _
    $region23: #{tpu_custom_call.1} parent=1 // pred_check_branch
      %54 = sbr.rel (0) target = $region25
    $region24: #{tpu_custom_call.1} parent=1 // pred_region
      %55 = dma.done [#allocation6], 192
    $region25: #{tpu_custom_call.1} parent=1 // pred_fallthru
      _
    %v56 = vld [vmem:[#allocation2] sm:$0xff]
    %v57 = vld [vmem:[#allocation2 + $0x8] sm:$0xff]
    %v58 = vld [vmem:[#allocation2 + $0x10] sm:$0xff]
    %v59 = vld [vmem:[#allocation2 + $0x18] sm:$0xff]
    %v60 = vld [vmem:[#allocation2 + $0x20] sm:$0xff]
    %v61 = vld [vmem:[#allocation2 + $0x28] sm:$0xff]
    %v62 = vld [vmem:[#allocation2 + $0x30] sm:$0xff]
    %v63 = vld [vmem:[#allocation2 + $0x38] sm:$0xff]
    %v64 = vld [vmem:[#allocation2 + $0x40] sm:$0xff]
    %v65 = vld [vmem:[#allocation2 + $0x48] sm:$0xff]
    %v66 = vld [vmem:[#allocation2 + $0x50] sm:$0xff]
    %v67 = vld [vmem:[#allocation2 + $0x58] sm:$0xff]
    %v68 = vld [vmem:[#allocation2 + $0x60] sm:$0xff]
    %v69 = vld [vmem:[#allocation2 + $0x68] sm:$0xff]
    %v70 = vld [vmem:[#allocation2 + $0x70] sm:$0xff]
    %v71 = vld [vmem:[#allocation2 + $0x78] sm:$0xff]
    %v72 = vld [vmem:[#allocation2 + $0x80] sm:$0xff]
    %v73 = vld [vmem:[#allocation2 + $0x88] sm:$0xff]
    %v74 = vld [vmem:[#allocation2 + $0x90] sm:$0xff]
    %v75 = vld [vmem:[#allocation2 + $0x98] sm:$0xff]
    %v76 = vld [vmem:[#allocation2 + $0xa0] sm:$0xff]
    %v77 = vld [vmem:[#allocation2 + $0xa8] sm:$0xff]
    %v78 = vld [vmem:[#allocation2 + $0xb0] sm:$0xff]
    %v79 = vld [vmem:[#allocation2 + $0xb8] sm:$0xff]
    %v80 = vld [vmem:[#allocation2 + $0xc0] sm:$0xff]
    %v81 = vld [vmem:[#allocation2 + $0xc8] sm:$0xff]
    %v82 = vld [vmem:[#allocation2 + $0xd0] sm:$0xff]
    %v83 = vld [vmem:[#allocation2 + $0xd8] sm:$0xff]
    %v84 = vld [vmem:[#allocation2 + $0xe0] sm:$0xff]
    %v85 = vld [vmem:[#allocation2 + $0xe8] sm:$0xff]
    %v86 = vld [vmem:[#allocation2 + $0xf0] sm:$0xff]
    %v87 = vld [vmem:[#allocation2 + $0xf8] sm:$0xff]
    %v88 = vld [vmem:[#allocation2 + $0x100] sm:$0xff]
    %v89 = vld [vmem:[#allocation2 + $0x108] sm:$0xff]
    %v90 = vld [vmem:[#allocation2 + $0x110] sm:$0xff]
    %v91 = vld [vmem:[#allocation2 + $0x118] sm:$0xff]
    %v92 = vld [vmem:[#allocation2 + $0x120] sm:$0xff]
    %v93 = vld [vmem:[#allocation2 + $0x128] sm:$0xff]
    %v94 = vld [vmem:[#allocation2 + $0x130] sm:$0xff]
    %v95 = vld [vmem:[#allocation2 + $0x138] sm:$0xff]
    %v96 = vld [vmem:[#allocation2 + $0x140] sm:$0xff]
    %v97 = vld [vmem:[#allocation2 + $0x148] sm:$0xff]
    %v98 = vld [vmem:[#allocation2 + $0x150] sm:$0xff]
    %v99 = vld [vmem:[#allocation2 + $0x158] sm:$0xff]
    %v100 = vld [vmem:[#allocation2 + $0x160] sm:$0xff]
    %v101 = vld [vmem:[#allocation2 + $0x168] sm:$0xff]
    %v102 = vld [vmem:[#allocation2 + $0x170] sm:$0xff]
    %v103 = vld [vmem:[#allocation2 + $0x178] sm:$0xff]
    %v104 = vld [vmem:[#allocation2 + $0x180] sm:$0xff]
    %v105 = vld [vmem:[#allocation2 + $0x188] sm:$0xff]
    %v106 = vld [vmem:[#allocation2 + $0x190] sm:$0xff]
    %v107 = vld [vmem:[#allocation2 + $0x198] sm:$0xff]
    %v108 = vld [vmem:[#allocation2 + $0x1a0] sm:$0xff]
    %v109 = vld [vmem:[#allocation2 + $0x1a8] sm:$0xff]
    %v110 = vld [vmem:[#allocation2 + $0x1b0] sm:$0xff]
    %v111 = vld [vmem:[#allocation2 + $0x1b8] sm:$0xff]
    %v112 = vld [vmem:[#allocation2 + $0x1c0] sm:$0xff]
    %v113 = vld [vmem:[#allocation2 + $0x1c8] sm:$0xff]
    %v114 = vld [vmem:[#allocation2 + $0x1d0] sm:$0xff]
    %v115 = vld [vmem:[#allocation2 + $0x1d8] sm:$0xff]
    %v116 = vld [vmem:[#allocation2 + $0x1e0] sm:$0xff]
    %v117 = vld [vmem:[#allocation2 + $0x1e8] sm:$0xff]
    %v118 = vld [vmem:[#allocation2 + $0x1f0] sm:$0xff]
    %v119 = vld [vmem:[#allocation2 + $0x1f8] sm:$0xff]
    %v120 = vpack.c.bf16 %v58, %v56
    %v121 = vpack.c.bf16 %v59, %v57
    %v122 = vpack.c.bf16 %v62, %v60
    %v123 = vpack.c.bf16 %v63, %v61
    %v124 = vpack.c.bf16 %v66, %v64
    %v125 = vpack.c.bf16 %v67, %v65
    %v126 = vpack.c.bf16 %v70, %v68
    %v127 = vpack.c.bf16 %v71, %v69
    %v128 = vpack.c.bf16 %v74, %v72
    %v129 = vpack.c.bf16 %v75, %v73
    %v130 = vpack.c.bf16 %v78, %v76
    %v131 = vpack.c.bf16 %v79, %v77
    %v132 = vpack.c.bf16 %v82, %v80
    %v133 = vpack.c.bf16 %v83, %v81
    %v134 = vpack.c.bf16 %v86, %v84
    %v135 = vpack.c.bf16 %v87, %v85
    %v136 = vpack.c.bf16 %v90, %v88
    %v137 = vpack.c.bf16 %v91, %v89
    %v138 = vpack.c.bf16 %v94, %v92
    %v139 = vpack.c.bf16 %v95, %v93
    %v140 = vpack.c.bf16 %v98, %v96
    %v141 = vpack.c.bf16 %v99, %v97
    %v142 = vpack.c.bf16 %v102, %v100
    %v143 = vpack.c.bf16 %v103, %v101
    %v144 = vpack.c.bf16 %v106, %v104
    %v145 = vpack.c.bf16 %v107, %v105
    %v146 = vpack.c.bf16 %v110, %v108
    %v147 = vpack.c.bf16 %v111, %v109
    %v148 = vpack.c.bf16 %v114, %v112
    %v149 = vpack.c.bf16 %v115, %v113
    %v150 = vpack.c.bf16 %v118, %v116
    %v151 = vpack.c.bf16 %v119, %v117
    %v152 = vld [vmem:[#allocation5] sm:$0xff]
    %v153 = vld [vmem:[#allocation5 + $0x8] sm:$0xff]
    %v154 = vld [vmem:[#allocation5 + $0x10] sm:$0xff]
    %v155 = vld [vmem:[#allocation5 + $0x18] sm:$0xff]
    %v156 = vld [vmem:[#allocation5 + $0x20] sm:$0xff]
    %v157 = vld [vmem:[#allocation5 + $0x28] sm:$0xff]
    %v158 = vld [vmem:[#allocation5 + $0x30] sm:$0xff]
    %v159 = vld [vmem:[#allocation5 + $0x38] sm:$0xff]
    %v160 = vld [vmem:[#allocation5 + $0x40] sm:$0xff]
    %v161 = vld [vmem:[#allocation5 + $0x48] sm:$0xff]
    %v162 = vld [vmem:[#allocation5 + $0x50] sm:$0xff]
    %v163 = vld [vmem:[#allocation5 + $0x58] sm:$0xff]
    %v164 = vld [vmem:[#allocation5 + $0x60] sm:$0xff]
    %v165 = vld [vmem:[#allocation5 + $0x68] sm:$0xff]
    %v166 = vld [vmem:[#allocation5 + $0x70] sm:$0xff]
    %v167 = vld [vmem:[#allocation5 + $0x78] sm:$0xff]
    %v168 = vld [vmem:[#allocation5 + $0x80] sm:$0xff]
    %v169 = vld [vmem:[#allocation5 + $0x88] sm:$0xff]
    %v170 = vld [vmem:[#allocation5 + $0x90] sm:$0xff]
    %v171 = vld [vmem:[#allocation5 + $0x98] sm:$0xff]
    %v172 = vld [vmem:[#allocation5 + $0xa0] sm:$0xff]
    %v173 = vld [vmem:[#allocation5 + $0xa8] sm:$0xff]
    %v174 = vld [vmem:[#allocation5 + $0xb0] sm:$0xff]
    %v175 = vld [vmem:[#allocation5 + $0xb8] sm:$0xff]
    %v176 = vld [vmem:[#allocation5 + $0xc0] sm:$0xff]
    %v177 = vld [vmem:[#allocation5 + $0xc8] sm:$0xff]
    %v178 = vld [vmem:[#allocation5 + $0xd0] sm:$0xff]
    %v179 = vld [vmem:[#allocation5 + $0xd8] sm:$0xff]
    %v180 = vld [vmem:[#allocation5 + $0xe0] sm:$0xff]
    %v181 = vld [vmem:[#allocation5 + $0xe8] sm:$0xff]
    %v182 = vld [vmem:[#allocation5 + $0xf0] sm:$0xff]
    %v183 = vld [vmem:[#allocation5 + $0xf8] sm:$0xff]
    %v184 = vld [vmem:[#allocation7] sm:$0x3]
    %v186 = vlaneseq
    %v187 = vshrl.u32 %v186, 7
    %v188 = vsub.s32 0, %v187
    %v189 = vrot.slane %v184, %v188
    %v190 = vlaneseq
    %v191 = vshrl.u32 %v190, 7
    %v192 = vsub.s32 1, %v191
    %v193 = vrot.slane %v184, %v192
    %v228 = vunpack.c.l.b16 %v152
    %v229 = vunpack.c.h.b16 %v152
    %v230 = vunpack.c.l.b16 %v153
    %v231 = vunpack.c.h.b16 %v153
    %v232 = vunpack.c.l.b16 %v154
    %v233 = vunpack.c.h.b16 %v154
    %v234 = vunpack.c.l.b16 %v155
    %v235 = vunpack.c.h.b16 %v155
    %v236 = vunpack.c.l.b16 %v156
    %v237 = vunpack.c.h.b16 %v156
    %v238 = vunpack.c.l.b16 %v157
    %v239 = vunpack.c.h.b16 %v157
    %v240 = vunpack.c.l.b16 %v158
    %v241 = vunpack.c.h.b16 %v158
    %v242 = vunpack.c.l.b16 %v159
    %v243 = vunpack.c.h.b16 %v159
    %v244 = vunpack.c.l.b16 %v160
    %v245 = vunpack.c.h.b16 %v160
    %v246 = vunpack.c.l.b16 %v161
    %v247 = vunpack.c.h.b16 %v161
    %v248 = vunpack.c.l.b16 %v162
    %v249 = vunpack.c.h.b16 %v162
    %v250 = vunpack.c.l.b16 %v163
    %v251 = vunpack.c.h.b16 %v163
    %v252 = vunpack.c.l.b16 %v164
    %v253 = vunpack.c.h.b16 %v164
    %v254 = vunpack.c.l.b16 %v165
    %v255 = vunpack.c.h.b16 %v165
    %v256 = vunpack.c.l.b16 %v166
    %v257 = vunpack.c.h.b16 %v166
    %v258 = vunpack.c.l.b16 %v167
    %v259 = vunpack.c.h.b16 %v167
    %v260 = vunpack.c.l.b16 %v168
    %v261 = vunpack.c.h.b16 %v168
    %v262 = vunpack.c.l.b16 %v169
    %v263 = vunpack.c.h.b16 %v169
    %v264 = vunpack.c.l.b16 %v170
    %v265 = vunpack.c.h.b16 %v170
    %v266 = vunpack.c.l.b16 %v171
    %v267 = vunpack.c.h.b16 %v171
    %v268 = vunpack.c.l.b16 %v172
    %v269 = vunpack.c.h.b16 %v172
    %v270 = vunpack.c.l.b16 %v173
    %v271 = vunpack.c.h.b16 %v173
    %v272 = vunpack.c.l.b16 %v174
    %v273 = vunpack.c.h.b16 %v174
    %v274 = vunpack.c.l.b16 %v175
    %v275 = vunpack.c.h.b16 %v175
    %v276 = vunpack.c.l.b16 %v176
    %v277 = vunpack.c.h.b16 %v176
    %v278 = vunpack.c.l.b16 %v177
    %v279 = vunpack.c.h.b16 %v177
    %v280 = vunpack.c.l.b16 %v178
    %v281 = vunpack.c.h.b16 %v178
    %v282 = vunpack.c.l.b16 %v179
    %v283 = vunpack.c.h.b16 %v179
    %v284 = vunpack.c.l.b16 %v180
    %v285 = vunpack.c.h.b16 %v180
    %v286 = vunpack.c.l.b16 %v181
    %v287 = vunpack.c.h.b16 %v181
    %v288 = vunpack.c.l.b16 %v182
    %v289 = vunpack.c.h.b16 %v182
    %v290 = vunpack.c.l.b16 %v183
    %v291 = vunpack.c.h.b16 %v183
    %v292 = vpack.c.b16 %v230, %v228
    %v293 = vpack.c.b16 %v231, %v229
    %v294 = vpack.c.b16 %v234, %v232
    %v295 = vpack.c.b16 %v235, %v233
    %v296 = vpack.c.b16 %v238, %v236
    %v297 = vpack.c.b16 %v239, %v237
    %v298 = vpack.c.b16 %v242, %v240
    %v299 = vpack.c.b16 %v243, %v241
    %v300 = vpack.c.b16 %v246, %v244
    %v301 = vpack.c.b16 %v247, %v245
    %v302 = vpack.c.b16 %v250, %v248
    %v303 = vpack.c.b16 %v251, %v249
    %v304 = vpack.c.b16 %v254, %v252
    %v305 = vpack.c.b16 %v255, %v253
    %v306 = vpack.c.b16 %v258, %v256
    %v307 = vpack.c.b16 %v259, %v257
    %v308 = vpack.c.b16 %v262, %v260
    %v309 = vpack.c.b16 %v263, %v261
    %v310 = vpack.c.b16 %v266, %v264
    %v311 = vpack.c.b16 %v267, %v265
    %v312 = vpack.c.b16 %v270, %v268
    %v313 = vpack.c.b16 %v271, %v269
    %v314 = vpack.c.b16 %v274, %v272
    %v315 = vpack.c.b16 %v275, %v273
    %v316 = vpack.c.b16 %v278, %v276
    %v317 = vpack.c.b16 %v279, %v277
    %v318 = vpack.c.b16 %v282, %v280
    %v319 = vpack.c.b16 %v283, %v281
    %v320 = vpack.c.b16 %v286, %v284
    %v321 = vpack.c.b16 %v287, %v285
    %v322 = vpack.c.b16 %v290, %v288
    %v323 = vpack.c.b16 %v291, %v289
    %356 = vmatprep.subr.bf16.mxu0 %v307
    %357 = vmatpush1.bf16.msra.mxu0 %v306
    %358 = vmatprep.subr.bf16.mxu0 %v305
    %359 = vmatpush1.bf16.msra.mxu0 %v304
    %360 = vmatprep.subr.bf16.mxu0 %v303
    %361 = vmatpush1.bf16.msra.mxu0 %v302
    %362 = vmatprep.subr.bf16.mxu0 %v301
    %363 = vmatpush1.bf16.msra.mxu0 %v300
    %364 = vmatprep.subr.bf16.mxu0 %v299
    %365 = vmatpush1.bf16.msra.mxu0 %v298
    %366 = vmatprep.subr.bf16.mxu0 %v297
    %367 = vmatpush1.bf16.msra.mxu0 %v296
    %368 = vmatprep.subr.bf16.mxu0 %v295
    %369 = vmatpush1.bf16.msra.mxu0 %v294
    %370 = vmatprep.subr.bf16.mxu0 %v293
    %371 = vmatpush1.bf16.msra.mxu0 %v292
    %372 = vmatprep.subr.bf16.mxu0 %v323
    %373 = vmatpush2.bf16.msra.mxu0 %v322
    %374 = vmatprep.subr.bf16.mxu0 %v321
    %375 = vmatpush2.bf16.msra.mxu0 %v320
    %376 = vmatprep.subr.bf16.mxu0 %v319
    %377 = vmatpush2.bf16.msra.mxu0 %v318
    %378 = vmatprep.subr.bf16.mxu0 %v317
    %379 = vmatpush2.bf16.msra.mxu0 %v316
    %380 = vmatprep.subr.bf16.mxu0 %v315
    %381 = vmatpush2.bf16.msra.mxu0 %v314
    %382 = vmatprep.subr.bf16.mxu0 %v313
    %383 = vmatpush2.bf16.msra.mxu0 %v312
    %384 = vmatprep.subr.bf16.mxu0 %v311
    %385 = vmatpush2.bf16.msra.mxu0 %v310
    %386 = vmatprep.subr.bf16.mxu0 %v309
    %387 = vmatpush2.bf16.msra.mxu0 %v308
    %388 = vmatprep.mubr.bf16.mxu0 %v121
    %389 = vmatmul.mubr.bf16.gmra.mxu0 %v120
    %v390 = vpop.f32.mrf.mxu0
    %v391 = vadd.f32 %v189, %v390
    %v392 = vpop.f32.mrf.mxu0
    %v393 = vadd.f32 %v193, %v392
    %v394 = vpop.f32.mrf.mxu0
    %v395 = vadd.f32 %v189, %v394
    %v396 = vpop.f32.mrf.mxu0
    %v397 = vadd.f32 %v193, %v396
    %398 = vmatprep.mubr.bf16.mxu0 %v123
    %399 = vmatmul.mubr.bf16.gmra.mxu0 %v122
    %v400 = vpop.f32.mrf.mxu0
    %v401 = vadd.f32 %v189, %v400
    %v402 = vpop.f32.mrf.mxu0
    %v403 = vadd.f32 %v193, %v402
    %v404 = vpop.f32.mrf.mxu0
    %v405 = vadd.f32 %v189, %v404
    %v406 = vpop.f32.mrf.mxu0
    %v407 = vadd.f32 %v193, %v406
    %408 = vmatprep.mubr.bf16.mxu0 %v125
    %409 = vmatmul.mubr.bf16.gmra.mxu0 %v124
    %v410 = vpop.f32.mrf.mxu0
    %v411 = vadd.f32 %v189, %v410
    %v412 = vpop.f32.mrf.mxu0
    %v413 = vadd.f32 %v193, %v412
    %v414 = vpop.f32.mrf.mxu0
    %v415 = vadd.f32 %v189, %v414
    %v416 = vpop.f32.mrf.mxu0
    %v417 = vadd.f32 %v193, %v416
    %418 = vmatprep.mubr.bf16.mxu0 %v127
    %419 = vmatmul.mubr.bf16.gmra.mxu0 %v126
    %v420 = vpop.f32.mrf.mxu0
    %v421 = vadd.f32 %v189, %v420
    %v422 = vpop.f32.mrf.mxu0
    %v423 = vadd.f32 %v193, %v422
    %v424 = vpop.f32.mrf.mxu0
    %v425 = vadd.f32 %v189, %v424
    %v426 = vpop.f32.mrf.mxu0
    %v427 = vadd.f32 %v193, %v426
    %428 = vmatprep.mubr.bf16.mxu0 %v129
    %429 = vmatmul.mubr.bf16.gmra.mxu0 %v128
    %v430 = vpop.f32.mrf.mxu0
    %v431 = vadd.f32 %v189, %v430
    %v432 = vpop.f32.mrf.mxu0
    %v433 = vadd.f32 %v193, %v432
    %v434 = vpop.f32.mrf.mxu0
    %v435 = vadd.f32 %v189, %v434
    %v436 = vpop.f32.mrf.mxu0
    %v437 = vadd.f32 %v193, %v436
    %438 = vmatprep.mubr.bf16.mxu0 %v131
    %439 = vmatmul.mubr.bf16.gmra.mxu0 %v130
    %v440 = vpop.f32.mrf.mxu0
    %v441 = vadd.f32 %v189, %v440
    %v442 = vpop.f32.mrf.mxu0
    %v443 = vadd.f32 %v193, %v442
    %v444 = vpop.f32.mrf.mxu0
    %v445 = vadd.f32 %v189, %v444
    %v446 = vpop.f32.mrf.mxu0
    %v447 = vadd.f32 %v193, %v446
    %448 = vmatprep.mubr.bf16.mxu0 %v133
    %449 = vmatmul.mubr.bf16.gmra.mxu0 %v132
    %v450 = vpop.f32.mrf.mxu0
    %v451 = vadd.f32 %v189, %v450
    %v452 = vpop.f32.mrf.mxu0
    %v453 = vadd.f32 %v193, %v452
    %v454 = vpop.f32.mrf.mxu0
    %v455 = vadd.f32 %v189, %v454
    %v456 = vpop.f32.mrf.mxu0
    %v457 = vadd.f32 %v193, %v456
    %458 = vmatprep.mubr.bf16.mxu0 %v135
    %459 = vmatmul.mubr.bf16.gmra.mxu0 %v134
    %v460 = vpop.f32.mrf.mxu0
    %v461 = vadd.f32 %v189, %v460
    %v462 = vpop.f32.mrf.mxu0
    %v463 = vadd.f32 %v193, %v462
    %v464 = vpop.f32.mrf.mxu0
    %v465 = vadd.f32 %v189, %v464
    %v466 = vpop.f32.mrf.mxu0
    %v467 = vadd.f32 %v193, %v466
    %468 = vmatprep.mubr.bf16.mxu0 %v137
    %469 = vmatmul.mubr.bf16.gmra.mxu0 %v136
    %v470 = vpop.f32.mrf.mxu0
    %v471 = vadd.f32 %v189, %v470
    %v472 = vpop.f32.mrf.mxu0
    %v473 = vadd.f32 %v193, %v472
    %v474 = vpop.f32.mrf.mxu0
    %v475 = vadd.f32 %v189, %v474
    %v476 = vpop.f32.mrf.mxu0
    %v477 = vadd.f32 %v193, %v476
    %478 = vmatprep.mubr.bf16.mxu0 %v139
    %479 = vmatmul.mubr.bf16.gmra.mxu0 %v138
    %v480 = vpop.f32.mrf.mxu0
    %v481 = vadd.f32 %v189, %v480
    %v482 = vpop.f32.mrf.mxu0
    %v483 = vadd.f32 %v193, %v482
    %v484 = vpop.f32.mrf.mxu0
    %v485 = vadd.f32 %v189, %v484
    %v486 = vpop.f32.mrf.mxu0
    %v487 = vadd.f32 %v193, %v486
    %488 = vmatprep.mubr.bf16.mxu0 %v141
    %489 = vmatmul.mubr.bf16.gmra.mxu0 %v140
    %v490 = vpop.f32.mrf.mxu0
    %v491 = vadd.f32 %v189, %v490
    %v492 = vpop.f32.mrf.mxu0
    %v493 = vadd.f32 %v193, %v492
    %v494 = vpop.f32.mrf.mxu0
    %v495 = vadd.f32 %v189, %v494
    %v496 = vpop.f32.mrf.mxu0
    %v497 = vadd.f32 %v193, %v496
    %498 = vmatprep.mubr.bf16.mxu0 %v143
    %499 = vmatmul.mubr.bf16.gmra.mxu0 %v142
    %v500 = vpop.f32.mrf.mxu0
    %v501 = vadd.f32 %v189, %v500
    %v502 = vpop.f32.mrf.mxu0
    %v503 = vadd.f32 %v193, %v502
    %v504 = vpop.f32.mrf.mxu0
    %v505 = vadd.f32 %v189, %v504
    %v506 = vpop.f32.mrf.mxu0
    %v507 = vadd.f32 %v193, %v506
    %508 = vmatprep.mubr.bf16.mxu0 %v145
    %509 = vmatmul.mubr.bf16.gmra.mxu0 %v144
    %v510 = vpop.f32.mrf.mxu0
    %v511 = vadd.f32 %v189, %v510
    %v512 = vpop.f32.mrf.mxu0
    %v513 = vadd.f32 %v193, %v512
    %v514 = vpop.f32.mrf.mxu0
    %v515 = vadd.f32 %v189, %v514
    %v516 = vpop.f32.mrf.mxu0
    %v517 = vadd.f32 %v193, %v516
    %518 = vmatprep.mubr.bf16.mxu0 %v147
    %519 = vmatmul.mubr.bf16.gmra.mxu0 %v146
    %v520 = vpop.f32.mrf.mxu0
    %v521 = vadd.f32 %v189, %v520
    %v522 = vpop.f32.mrf.mxu0
    %v523 = vadd.f32 %v193, %v522
    %v524 = vpop.f32.mrf.mxu0
    %v525 = vadd.f32 %v189, %v524
    %v526 = vpop.f32.mrf.mxu0
    %v527 = vadd.f32 %v193, %v526
    %528 = vmatprep.mubr.bf16.mxu0 %v149
    %529 = vmatmul.mubr.bf16.gmra.mxu0 %v148
    %v530 = vpop.f32.mrf.mxu0
    %v531 = vadd.f32 %v189, %v530
    %v532 = vpop.f32.mrf.mxu0
    %v533 = vadd.f32 %v193, %v532
    %v534 = vpop.f32.mrf.mxu0
    %v535 = vadd.f32 %v189, %v534
    %v536 = vpop.f32.mrf.mxu0
    %v537 = vadd.f32 %v193, %v536
    %538 = vmatprep.mubr.bf16.mxu0 %v151
    %539 = vmatmul.mubr.bf16.gmra.mxu0 %v150
    %v540 = vpop.f32.mrf.mxu0
    %v541 = vadd.f32 %v189, %v540
    %v542 = vpop.f32.mrf.mxu0
    %v543 = vadd.f32 %v193, %v542
    %v544 = vpop.f32.mrf.mxu0
    %v545 = vadd.f32 %v189, %v544
    %v546 = vpop.f32.mrf.mxu0
    %v547 = vadd.f32 %v193, %v546
    %548 = vdwg.mxu0
    %v549 = vmax.f32 %v391, 0.0
    %v550 = vmax.f32 %v393, 0.0
    %v551 = vmax.f32 %v395, 0.0
    %v552 = vmax.f32 %v397, 0.0
    %v553 = vmax.f32 %v401, 0.0
    %v554 = vmax.f32 %v403, 0.0
    %v555 = vmax.f32 %v405, 0.0
    %v556 = vmax.f32 %v407, 0.0
    %v557 = vmax.f32 %v411, 0.0
    %v558 = vmax.f32 %v413, 0.0
    %v559 = vmax.f32 %v415, 0.0
    %v560 = vmax.f32 %v417, 0.0
    %v561 = vmax.f32 %v421, 0.0
    %v562 = vmax.f32 %v423, 0.0
    %v563 = vmax.f32 %v425, 0.0
    %v564 = vmax.f32 %v427, 0.0
    %v565 = vmax.f32 %v431, 0.0
    %v566 = vmax.f32 %v433, 0.0
    %v567 = vmax.f32 %v435, 0.0
    %v568 = vmax.f32 %v437, 0.0
    %v569 = vmax.f32 %v441, 0.0
    %v570 = vmax.f32 %v443, 0.0
    %v571 = vmax.f32 %v445, 0.0
    %v572 = vmax.f32 %v447, 0.0
    %v573 = vmax.f32 %v451, 0.0
    %v574 = vmax.f32 %v453, 0.0
    %v575 = vmax.f32 %v455, 0.0
    %v576 = vmax.f32 %v457, 0.0
    %v577 = vmax.f32 %v461, 0.0
    %v578 = vmax.f32 %v463, 0.0
    %v579 = vmax.f32 %v465, 0.0
    %v580 = vmax.f32 %v467, 0.0
    %v581 = vmax.f32 %v471, 0.0
    %v582 = vmax.f32 %v473, 0.0
    %v583 = vmax.f32 %v475, 0.0
    %v584 = vmax.f32 %v477, 0.0
    %v585 = vmax.f32 %v481, 0.0
    %v586 = vmax.f32 %v483, 0.0
    %v587 = vmax.f32 %v485, 0.0
    %v588 = vmax.f32 %v487, 0.0
    %v589 = vmax.f32 %v491, 0.0
    %v590 = vmax.f32 %v493, 0.0
    %v591 = vmax.f32 %v495, 0.0
    %v592 = vmax.f32 %v497, 0.0
    %v593 = vmax.f32 %v501, 0.0
    %v594 = vmax.f32 %v503, 0.0
    %v595 = vmax.f32 %v505, 0.0
    %v596 = vmax.f32 %v507, 0.0
    %v597 = vmax.f32 %v511, 0.0
    %v598 = vmax.f32 %v513, 0.0
    %v599 = vmax.f32 %v515, 0.0
    %v600 = vmax.f32 %v517, 0.0
    %v601 = vmax.f32 %v521, 0.0
    %v602 = vmax.f32 %v523, 0.0
    %v603 = vmax.f32 %v525, 0.0
    %v604 = vmax.f32 %v527, 0.0
    %v605 = vmax.f32 %v531, 0.0
    %v606 = vmax.f32 %v533, 0.0
    %v607 = vmax.f32 %v535, 0.0
    %v608 = vmax.f32 %v537, 0.0
    %v609 = vmax.f32 %v541, 0.0
    %v610 = vmax.f32 %v543, 0.0
    %v611 = vmax.f32 %v545, 0.0
    %v612 = vmax.f32 %v547, 0.0
    %v613 = vpack.c.bf16 %v551, %v549
    %v614 = vpack.c.bf16 %v552, %v550
    %v615 = vpack.c.bf16 %v555, %v553
    %v616 = vpack.c.bf16 %v556, %v554
    %v617 = vpack.c.bf16 %v559, %v557
    %v618 = vpack.c.bf16 %v560, %v558
    %v619 = vpack.c.bf16 %v563, %v561
    %v620 = vpack.c.bf16 %v564, %v562
    %v621 = vpack.c.bf16 %v567, %v565
    %v622 = vpack.c.bf16 %v568, %v566
    %v623 = vpack.c.bf16 %v571, %v569
    %v624 = vpack.c.bf16 %v572, %v570
    %v625 = vpack.c.bf16 %v575, %v573
    %v626 = vpack.c.bf16 %v576, %v574
    %v627 = vpack.c.bf16 %v579, %v577
    %v628 = vpack.c.bf16 %v580, %v578
    %v629 = vpack.c.bf16 %v583, %v581
    %v630 = vpack.c.bf16 %v584, %v582
    %v631 = vpack.c.bf16 %v587, %v585
    %v632 = vpack.c.bf16 %v588, %v586
    %v633 = vpack.c.bf16 %v591, %v589
    %v634 = vpack.c.bf16 %v592, %v590
    %v635 = vpack.c.bf16 %v595, %v593
    %v636 = vpack.c.bf16 %v596, %v594
    %v637 = vpack.c.bf16 %v599, %v597
    %v638 = vpack.c.bf16 %v600, %v598
    %v639 = vpack.c.bf16 %v603, %v601
    %v640 = vpack.c.bf16 %v604, %v602
    %v641 = vpack.c.bf16 %v607, %v605
    %v642 = vpack.c.bf16 %v608, %v606
    %v643 = vpack.c.bf16 %v611, %v609
    %v644 = vpack.c.bf16 %v612, %v610
    %s645 = scalar_lea.vmem [#allocation5], 256
    %v646 = vld [vmem:[%s645] sm:$0xff]
    %v647 = vld [vmem:[%s645 + $0x8] sm:$0xff]
    %v648 = vld [vmem:[%s645 + $0x10] sm:$0xff]
    %v649 = vld [vmem:[%s645 + $0x18] sm:$0xff]
    %v650 = vld [vmem:[%s645 + $0x20] sm:$0xff]
    %v651 = vld [vmem:[%s645 + $0x28] sm:$0xff]
    %v652 = vld [vmem:[%s645 + $0x30] sm:$0xff]
    %v653 = vld [vmem:[%s645 + $0x38] sm:$0xff]
    %v654 = vld [vmem:[%s645 + $0x40] sm:$0xff]
    %v655 = vld [vmem:[%s645 + $0x48] sm:$0xff]
    %v656 = vld [vmem:[%s645 + $0x50] sm:$0xff]
    %v657 = vld [vmem:[%s645 + $0x58] sm:$0xff]
    %v658 = vld [vmem:[%s645 + $0x60] sm:$0xff]
    %v659 = vld [vmem:[%s645 + $0x68] sm:$0xff]
    %v660 = vld [vmem:[%s645 + $0x70] sm:$0xff]
    %v661 = vld [vmem:[%s645 + $0x78] sm:$0xff]
    %v662 = vld [vmem:[%s645 + $0x80] sm:$0xff]
    %v663 = vld [vmem:[%s645 + $0x88] sm:$0xff]
    %v664 = vld [vmem:[%s645 + $0x90] sm:$0xff]
    %v665 = vld [vmem:[%s645 + $0x98] sm:$0xff]
    %v666 = vld [vmem:[%s645 + $0xa0] sm:$0xff]
    %v667 = vld [vmem:[%s645 + $0xa8] sm:$0xff]
    %v668 = vld [vmem:[%s645 + $0xb0] sm:$0xff]
    %v669 = vld [vmem:[%s645 + $0xb8] sm:$0xff]
    %v670 = vld [vmem:[%s645 + $0xc0] sm:$0xff]
    %v671 = vld [vmem:[%s645 + $0xc8] sm:$0xff]
    %v672 = vld [vmem:[%s645 + $0xd0] sm:$0xff]
    %v673 = vld [vmem:[%s645 + $0xd8] sm:$0xff]
    %v674 = vld [vmem:[%s645 + $0xe0] sm:$0xff]
    %v675 = vld [vmem:[%s645 + $0xe8] sm:$0xff]
    %v676 = vld [vmem:[%s645 + $0xf0] sm:$0xff]
    %v677 = vld [vmem:[%s645 + $0xf8] sm:$0xff]
    %s678 = scalar_lea.vmem [#allocation7], 2
    %v679 = vld [vmem:[%s678] sm:$0x3]
    %v681 = vlaneseq
    %v682 = vshrl.u32 %v681, 7
    %v683 = vsub.s32 0, %v682
    %v684 = vrot.slane %v679, %v683
    %v685 = vlaneseq
    %v686 = vshrl.u32 %v685, 7
    %v687 = vsub.s32 1, %v686
    %v688 = vrot.slane %v679, %v687
    %v723 = vunpack.c.l.b16 %v646
    %v724 = vunpack.c.h.b16 %v646
    %v725 = vunpack.c.l.b16 %v647
    %v726 = vunpack.c.h.b16 %v647
    %v727 = vunpack.c.l.b16 %v648
    %v728 = vunpack.c.h.b16 %v648
    %v729 = vunpack.c.l.b16 %v649
    %v730 = vunpack.c.h.b16 %v649
    %v731 = vunpack.c.l.b16 %v650
    %v732 = vunpack.c.h.b16 %v650
    %v733 = vunpack.c.l.b16 %v651
    %v734 = vunpack.c.h.b16 %v651
    %v735 = vunpack.c.l.b16 %v652
    %v736 = vunpack.c.h.b16 %v652
    %v737 = vunpack.c.l.b16 %v653
    %v738 = vunpack.c.h.b16 %v653
    %v739 = vunpack.c.l.b16 %v654
    %v740 = vunpack.c.h.b16 %v654
    %v741 = vunpack.c.l.b16 %v655
    %v742 = vunpack.c.h.b16 %v655
    %v743 = vunpack.c.l.b16 %v656
    %v744 = vunpack.c.h.b16 %v656
    %v745 = vunpack.c.l.b16 %v657
    %v746 = vunpack.c.h.b16 %v657
    %v747 = vunpack.c.l.b16 %v658
    %v748 = vunpack.c.h.b16 %v658
    %v749 = vunpack.c.l.b16 %v659
    %v750 = vunpack.c.h.b16 %v659
    %v751 = vunpack.c.l.b16 %v660
    %v752 = vunpack.c.h.b16 %v660
    %v753 = vunpack.c.l.b16 %v661
    %v754 = vunpack.c.h.b16 %v661
    %v755 = vunpack.c.l.b16 %v662
    %v756 = vunpack.c.h.b16 %v662
    %v757 = vunpack.c.l.b16 %v663
    %v758 = vunpack.c.h.b16 %v663
    %v759 = vunpack.c.l.b16 %v664
    %v760 = vunpack.c.h.b16 %v664
    %v761 = vunpack.c.l.b16 %v665
    %v762 = vunpack.c.h.b16 %v665
    %v763 = vunpack.c.l.b16 %v666
    %v764 = vunpack.c.h.b16 %v666
    %v765 = vunpack.c.l.b16 %v667
    %v766 = vunpack.c.h.b16 %v667
    %v767 = vunpack.c.l.b16 %v668
    %v768 = vunpack.c.h.b16 %v668
    %v769 = vunpack.c.l.b16 %v669
    %v770 = vunpack.c.h.b16 %v669
    %v771 = vunpack.c.l.b16 %v670
    %v772 = vunpack.c.h.b16 %v670
    %v773 = vunpack.c.l.b16 %v671
    %v774 = vunpack.c.h.b16 %v671
    %v775 = vunpack.c.l.b16 %v672
    %v776 = vunpack.c.h.b16 %v672
    %v777 = vunpack.c.l.b16 %v673
    %v778 = vunpack.c.h.b16 %v673
    %v779 = vunpack.c.l.b16 %v674
    %v780 = vunpack.c.h.b16 %v674
    %v781 = vunpack.c.l.b16 %v675
    %v782 = vunpack.c.h.b16 %v675
    %v783 = vunpack.c.l.b16 %v676
    %v784 = vunpack.c.h.b16 %v676
    %v785 = vunpack.c.l.b16 %v677
    %v786 = vunpack.c.h.b16 %v677
    %v787 = vpack.c.b16 %v725, %v723
    %v788 = vpack.c.b16 %v726, %v724
    %v789 = vpack.c.b16 %v729, %v727
    %v790 = vpack.c.b16 %v730, %v728
    %v791 = vpack.c.b16 %v733, %v731
    %v792 = vpack.c.b16 %v734, %v732
    %v793 = vpack.c.b16 %v737, %v735
    %v794 = vpack.c.b16 %v738, %v736
    %v795 = vpack.c.b16 %v741, %v739
    %v796 = vpack.c.b16 %v742, %v740
    %v797 = vpack.c.b16 %v745, %v743
    %v798 = vpack.c.b16 %v746, %v744
    %v799 = vpack.c.b16 %v749, %v747
    %v800 = vpack.c.b16 %v750, %v748
    %v801 = vpack.c.b16 %v753, %v751
    %v802 = vpack.c.b16 %v754, %v752
    %v803 = vpack.c.b16 %v757, %v755
    %v804 = vpack.c.b16 %v758, %v756
    %v805 = vpack.c.b16 %v761, %v759
    %v806 = vpack.c.b16 %v762, %v760
    %v807 = vpack.c.b16 %v765, %v763
    %v808 = vpack.c.b16 %v766, %v764
    %v809 = vpack.c.b16 %v769, %v767
    %v810 = vpack.c.b16 %v770, %v768
    %v811 = vpack.c.b16 %v773, %v771
    %v812 = vpack.c.b16 %v774, %v772
    %v813 = vpack.c.b16 %v777, %v775
    %v814 = vpack.c.b16 %v778, %v776
    %v815 = vpack.c.b16 %v781, %v779
    %v816 = vpack.c.b16 %v782, %v780
    %v817 = vpack.c.b16 %v785, %v783
    %v818 = vpack.c.b16 %v786, %v784
    %851 = vmatprep.subr.bf16.mxu0 %v802
    %852 = vmatpush1.bf16.msra.mxu0 %v801
    %853 = vmatprep.subr.bf16.mxu0 %v800
    %854 = vmatpush1.bf16.msra.mxu0 %v799
    %855 = vmatprep.subr.bf16.mxu0 %v798
    %856 = vmatpush1.bf16.msra.mxu0 %v797
    %857 = vmatprep.subr.bf16.mxu0 %v796
    %858 = vmatpush1.bf16.msra.mxu0 %v795
    %859 = vmatprep.subr.bf16.mxu0 %v794
    %860 = vmatpush1.bf16.msra.mxu0 %v793
    %861 = vmatprep.subr.bf16.mxu0 %v792
    %862 = vmatpush1.bf16.msra.mxu0 %v791
    %863 = vmatprep.subr.bf16.mxu0 %v790
    %864 = vmatpush1.bf16.msra.mxu0 %v789
    %865 = vmatprep.subr.bf16.mxu0 %v788
    %866 = vmatpush1.bf16.msra.mxu0 %v787
    %867 = vmatprep.subr.bf16.mxu0 %v818
    %868 = vmatpush2.bf16.msra.mxu0 %v817
    %869 = vmatprep.subr.bf16.mxu0 %v816
    %870 = vmatpush2.bf16.msra.mxu0 %v815
    %871 = vmatprep.subr.bf16.mxu0 %v814
    %872 = vmatpush2.bf16.msra.mxu0 %v813
    %873 = vmatprep.subr.bf16.mxu0 %v812
    %874 = vmatpush2.bf16.msra.mxu0 %v811
    %875 = vmatprep.subr.bf16.mxu0 %v810
    %876 = vmatpush2.bf16.msra.mxu0 %v809
    %877 = vmatprep.subr.bf16.mxu0 %v808
    %878 = vmatpush2.bf16.msra.mxu0 %v807
    %879 = vmatprep.subr.bf16.mxu0 %v806
    %880 = vmatpush2.bf16.msra.mxu0 %v805
    %881 = vmatprep.subr.bf16.mxu0 %v804
    %882 = vmatpush2.bf16.msra.mxu0 %v803
    %883 = vmatprep.mubr.bf16.mxu0 %v614
    %884 = vmatmul.mubr.bf16.gmra.mxu0 %v613
    %v885 = vpop.f32.mrf.mxu0
    %v886 = vadd.f32 %v684, %v885
    %v887 = vpop.f32.mrf.mxu0
    %v888 = vadd.f32 %v688, %v887
    %v889 = vpop.f32.mrf.mxu0
    %v890 = vadd.f32 %v684, %v889
    %v891 = vpop.f32.mrf.mxu0
    %v892 = vadd.f32 %v688, %v891
    %893 = vmatprep.mubr.bf16.mxu0 %v616
    %894 = vmatmul.mubr.bf16.gmra.mxu0 %v615
    %v895 = vpop.f32.mrf.mxu0
    %v896 = vadd.f32 %v684, %v895
    %v897 = vpop.f32.mrf.mxu0
    %v898 = vadd.f32 %v688, %v897
    %v899 = vpop.f32.mrf.mxu0
    %v900 = vadd.f32 %v684, %v899
    %v901 = vpop.f32.mrf.mxu0
    %v902 = vadd.f32 %v688, %v901
    %903 = vmatprep.mubr.bf16.mxu0 %v618
    %904 = vmatmul.mubr.bf16.gmra.mxu0 %v617
    %v905 = vpop.f32.mrf.mxu0
    %v906 = vadd.f32 %v684, %v905
    %v907 = vpop.f32.mrf.mxu0
    %v908 = vadd.f32 %v688, %v907
    %v909 = vpop.f32.mrf.mxu0
    %v910 = vadd.f32 %v684, %v909
    %v911 = vpop.f32.mrf.mxu0
    %v912 = vadd.f32 %v688, %v911
    %913 = vmatprep.mubr.bf16.mxu0 %v620
    %914 = vmatmul.mubr.bf16.gmra.mxu0 %v619
    %v915 = vpop.f32.mrf.mxu0
    %v916 = vadd.f32 %v684, %v915
    %v917 = vpop.f32.mrf.mxu0
    %v918 = vadd.f32 %v688, %v917
    %v919 = vpop.f32.mrf.mxu0
    %v920 = vadd.f32 %v684, %v919
    %v921 = vpop.f32.mrf.mxu0
    %v922 = vadd.f32 %v688, %v921
    %923 = vmatprep.mubr.bf16.mxu0 %v622
    %924 = vmatmul.mubr.bf16.gmra.mxu0 %v621
    %v925 = vpop.f32.mrf.mxu0
    %v926 = vadd.f32 %v684, %v925
    %v927 = vpop.f32.mrf.mxu0
    %v928 = vadd.f32 %v688, %v927
    %v929 = vpop.f32.mrf.mxu0
    %v930 = vadd.f32 %v684, %v929
    %v931 = vpop.f32.mrf.mxu0
    %v932 = vadd.f32 %v688, %v931
    %933 = vmatprep.mubr.bf16.mxu0 %v624
    %934 = vmatmul.mubr.bf16.gmra.mxu0 %v623
    %v935 = vpop.f32.mrf.mxu0
    %v936 = vadd.f32 %v684, %v935
    %v937 = vpop.f32.mrf.mxu0
    %v938 = vadd.f32 %v688, %v937
    %v939 = vpop.f32.mrf.mxu0
    %v940 = vadd.f32 %v684, %v939
    %v941 = vpop.f32.mrf.mxu0
    %v942 = vadd.f32 %v688, %v941
    %943 = vmatprep.mubr.bf16.mxu0 %v626
    %944 = vmatmul.mubr.bf16.gmra.mxu0 %v625
    %v945 = vpop.f32.mrf.mxu0
    %v946 = vadd.f32 %v684, %v945
    %v947 = vpop.f32.mrf.mxu0
    %v948 = vadd.f32 %v688, %v947
    %v949 = vpop.f32.mrf.mxu0
    %v950 = vadd.f32 %v684, %v949
    %v951 = vpop.f32.mrf.mxu0
    %v952 = vadd.f32 %v688, %v951
    %953 = vmatprep.mubr.bf16.mxu0 %v628
    %954 = vmatmul.mubr.bf16.gmra.mxu0 %v627
    %v955 = vpop.f32.mrf.mxu0
    %v956 = vadd.f32 %v684, %v955
    %v957 = vpop.f32.mrf.mxu0
    %v958 = vadd.f32 %v688, %v957
    %v959 = vpop.f32.mrf.mxu0
    %v960 = vadd.f32 %v684, %v959
    %v961 = vpop.f32.mrf.mxu0
    %v962 = vadd.f32 %v688, %v961
    %963 = vmatprep.mubr.bf16.mxu0 %v630
    %964 = vmatmul.mubr.bf16.gmra.mxu0 %v629
    %v965 = vpop.f32.mrf.mxu0
    %v966 = vadd.f32 %v684, %v965
    %v967 = vpop.f32.mrf.mxu0
    %v968 = vadd.f32 %v688, %v967
    %v969 = vpop.f32.mrf.mxu0
    %v970 = vadd.f32 %v684, %v969
    %v971 = vpop.f32.mrf.mxu0
    %v972 = vadd.f32 %v688, %v971
    %973 = vmatprep.mubr.bf16.mxu0 %v632
    %974 = vmatmul.mubr.bf16.gmra.mxu0 %v631
    %v975 = vpop.f32.mrf.mxu0
    %v976 = vadd.f32 %v684, %v975
    %v977 = vpop.f32.mrf.mxu0
    %v978 = vadd.f32 %v688, %v977
    %v979 = vpop.f32.mrf.mxu0
    %v980 = vadd.f32 %v684, %v979
    %v981 = vpop.f32.mrf.mxu0
    %v982 = vadd.f32 %v688, %v981
    %983 = vmatprep.mubr.bf16.mxu0 %v634
    %984 = vmatmul.mubr.bf16.gmra.mxu0 %v633
    %v985 = vpop.f32.mrf.mxu0
    %v986 = vadd.f32 %v684, %v985
    %v987 = vpop.f32.mrf.mxu0
    %v988 = vadd.f32 %v688, %v987
    %v989 = vpop.f32.mrf.mxu0
    %v990 = vadd.f32 %v684, %v989
    %v991 = vpop.f32.mrf.mxu0
    %v992 = vadd.f32 %v688, %v991
    %993 = vmatprep.mubr.bf16.mxu0 %v636
    %994 = vmatmul.mubr.bf16.gmra.mxu0 %v635
    %v995 = vpop.f32.mrf.mxu0
    %v996 = vadd.f32 %v684, %v995
    %v997 = vpop.f32.mrf.mxu0
    %v998 = vadd.f32 %v688, %v997
    %v999 = vpop.f32.mrf.mxu0
    %v1000 = vadd.f32 %v684, %v999
    %v1001 = vpop.f32.mrf.mxu0
    %v1002 = vadd.f32 %v688, %v1001
    %1003 = vmatprep.mubr.bf16.mxu0 %v638
    %1004 = vmatmul.mubr.bf16.gmra.mxu0 %v637
    %v1005 = vpop.f32.mrf.mxu0
    %v1006 = vadd.f32 %v684, %v1005
    %v1007 = vpop.f32.mrf.mxu0
    %v1008 = vadd.f32 %v688, %v1007
    %v1009 = vpop.f32.mrf.mxu0
    %v1010 = vadd.f32 %v684, %v1009
    %v1011 = vpop.f32.mrf.mxu0
    %v1012 = vadd.f32 %v688, %v1011
    %1013 = vmatprep.mubr.bf16.mxu0 %v640
    %1014 = vmatmul.mubr.bf16.gmra.mxu0 %v639
    %v1015 = vpop.f32.mrf.mxu0
    %v1016 = vadd.f32 %v684, %v1015
    %v1017 = vpop.f32.mrf.mxu0
    %v1018 = vadd.f32 %v688, %v1017
    %v1019 = vpop.f32.mrf.mxu0
    %v1020 = vadd.f32 %v684, %v1019
    %v1021 = vpop.f32.mrf.mxu0
    %v1022 = vadd.f32 %v688, %v1021
    %1023 = vmatprep.mubr.bf16.mxu0 %v642
    %1024 = vmatmul.mubr.bf16.gmra.mxu0 %v641
    %v1025 = vpop.f32.mrf.mxu0
    %v1026 = vadd.f32 %v684, %v1025
    %v1027 = vpop.f32.mrf.mxu0
    %v1028 = vadd.f32 %v688, %v1027
    %v1029 = vpop.f32.mrf.mxu0
    %v1030 = vadd.f32 %v684, %v1029
    %v1031 = vpop.f32.mrf.mxu0
    %v1032 = vadd.f32 %v688, %v1031
    %1033 = vmatprep.mubr.bf16.mxu0 %v644
    %1034 = vmatmul.mubr.bf16.gmra.mxu0 %v643
    %v1035 = vpop.f32.mrf.mxu0
    %v1036 = vadd.f32 %v684, %v1035
    %v1037 = vpop.f32.mrf.mxu0
    %v1038 = vadd.f32 %v688, %v1037
    %v1039 = vpop.f32.mrf.mxu0
    %v1040 = vadd.f32 %v684, %v1039
    %v1041 = vpop.f32.mrf.mxu0
    %v1042 = vadd.f32 %v688, %v1041
    %1043 = vdwg.mxu0
    %v1044 = vpack.c.bf16 %v890, %v886
    %v1045 = vpack.c.bf16 %v892, %v888
    %v1046 = vpack.c.bf16 %v900, %v896
    %v1047 = vpack.c.bf16 %v902, %v898
    %v1048 = vpack.c.bf16 %v910, %v906
    %v1049 = vpack.c.bf16 %v912, %v908
    %v1050 = vpack.c.bf16 %v920, %v916
    %v1051 = vpack.c.bf16 %v922, %v918
    %v1052 = vpack.c.bf16 %v930, %v926
    %v1053 = vpack.c.bf16 %v932, %v928
    %v1054 = vpack.c.bf16 %v940, %v936
    %v1055 = vpack.c.bf16 %v942, %v938
    %v1056 = vpack.c.bf16 %v950, %v946
    %v1057 = vpack.c.bf16 %v952, %v948
    %v1058 = vpack.c.bf16 %v960, %v956
    %v1059 = vpack.c.bf16 %v962, %v958
    %v1060 = vpack.c.bf16 %v970, %v966
    %v1061 = vpack.c.bf16 %v972, %v968
    %v1062 = vpack.c.bf16 %v980, %v976
    %v1063 = vpack.c.bf16 %v982, %v978
    %v1064 = vpack.c.bf16 %v990, %v986
    %v1065 = vpack.c.bf16 %v992, %v988
    %v1066 = vpack.c.bf16 %v1000, %v996
    %v1067 = vpack.c.bf16 %v1002, %v998
    %v1068 = vpack.c.bf16 %v1010, %v1006
    %v1069 = vpack.c.bf16 %v1012, %v1008
    %v1070 = vpack.c.bf16 %v1020, %v1016
    %v1071 = vpack.c.bf16 %v1022, %v1018
    %v1072 = vpack.c.bf16 %v1030, %v1026
    %v1073 = vpack.c.bf16 %v1032, %v1028
    %v1074 = vpack.c.bf16 %v1040, %v1036
    %v1075 = vpack.c.bf16 %v1042, %v1038
    %s1076 = scalar_lea.vmem [#allocation5], 512
    %v1077 = vld [vmem:[%s1076] sm:$0xff]
    %v1078 = vld [vmem:[%s1076 + $0x8] sm:$0xff]
    %v1079 = vld [vmem:[%s1076 + $0x10] sm:$0xff]
    %v1080 = vld [vmem:[%s1076 + $0x18] sm:$0xff]
    %v1081 = vld [vmem:[%s1076 + $0x20] sm:$0xff]
    %v1082 = vld [vmem:[%s1076 + $0x28] sm:$0xff]
    %v1083 = vld [vmem:[%s1076 + $0x30] sm:$0xff]
    %v1084 = vld [vmem:[%s1076 + $0x38] sm:$0xff]
    %v1085 = vld [vmem:[%s1076 + $0x40] sm:$0xff]
    %v1086 = vld [vmem:[%s1076 + $0x48] sm:$0xff]
    %v1087 = vld [vmem:[%s1076 + $0x50] sm:$0xff]
    %v1088 = vld [vmem:[%s1076 + $0x58] sm:$0xff]
    %v1089 = vld [vmem:[%s1076 + $0x60] sm:$0xff]
    %v1090 = vld [vmem:[%s1076 + $0x68] sm:$0xff]
    %v1091 = vld [vmem:[%s1076 + $0x70] sm:$0xff]
    %v1092 = vld [vmem:[%s1076 + $0x78] sm:$0xff]
    %v1093 = vld [vmem:[%s1076 + $0x80] sm:$0xff]
    %v1094 = vld [vmem:[%s1076 + $0x88] sm:$0xff]
    %v1095 = vld [vmem:[%s1076 + $0x90] sm:$0xff]
    %v1096 = vld [vmem:[%s1076 + $0x98] sm:$0xff]
    %v1097 = vld [vmem:[%s1076 + $0xa0] sm:$0xff]
    %v1098 = vld [vmem:[%s1076 + $0xa8] sm:$0xff]
    %v1099 = vld [vmem:[%s1076 + $0xb0] sm:$0xff]
    %v1100 = vld [vmem:[%s1076 + $0xb8] sm:$0xff]
    %v1101 = vld [vmem:[%s1076 + $0xc0] sm:$0xff]
    %v1102 = vld [vmem:[%s1076 + $0xc8] sm:$0xff]
    %v1103 = vld [vmem:[%s1076 + $0xd0] sm:$0xff]
    %v1104 = vld [vmem:[%s1076 + $0xd8] sm:$0xff]
    %v1105 = vld [vmem:[%s1076 + $0xe0] sm:$0xff]
    %v1106 = vld [vmem:[%s1076 + $0xe8] sm:$0xff]
    %v1107 = vld [vmem:[%s1076 + $0xf0] sm:$0xff]
    %v1108 = vld [vmem:[%s1076 + $0xf8] sm:$0xff]
    %s1109 = scalar_lea.vmem [#allocation7], 4
    %v1110 = vld [vmem:[%s1109] sm:$0x3]
    %v1112 = vlaneseq
    %v1113 = vshrl.u32 %v1112, 7
    %v1114 = vsub.s32 0, %v1113
    %v1115 = vrot.slane %v1110, %v1114
    %v1116 = vlaneseq
    %v1117 = vshrl.u32 %v1116, 7
    %v1118 = vsub.s32 1, %v1117
    %v1119 = vrot.slane %v1110, %v1118
    %v1154 = vunpack.c.l.b16 %v1077
    %v1155 = vunpack.c.h.b16 %v1077
    %v1156 = vunpack.c.l.b16 %v1078
    %v1157 = vunpack.c.h.b16 %v1078
    %v1158 = vunpack.c.l.b16 %v1079
    %v1159 = vunpack.c.h.b16 %v1079
    %v1160 = vunpack.c.l.b16 %v1080
    %v1161 = vunpack.c.h.b16 %v1080
    %v1162 = vunpack.c.l.b16 %v1081
    %v1163 = vunpack.c.h.b16 %v1081
    %v1164 = vunpack.c.l.b16 %v1082
    %v1165 = vunpack.c.h.b16 %v1082
    %v1166 = vunpack.c.l.b16 %v1083
    %v1167 = vunpack.c.h.b16 %v1083
    %v1168 = vunpack.c.l.b16 %v1084
    %v1169 = vunpack.c.h.b16 %v1084
    %v1170 = vunpack.c.l.b16 %v1085
    %v1171 = vunpack.c.h.b16 %v1085
    %v1172 = vunpack.c.l.b16 %v1086
    %v1173 = vunpack.c.h.b16 %v1086
    %v1174 = vunpack.c.l.b16 %v1087
    %v1175 = vunpack.c.h.b16 %v1087
    %v1176 = vunpack.c.l.b16 %v1088
    %v1177 = vunpack.c.h.b16 %v1088
    %v1178 = vunpack.c.l.b16 %v1089
    %v1179 = vunpack.c.h.b16 %v1089
    %v1180 = vunpack.c.l.b16 %v1090
    %v1181 = vunpack.c.h.b16 %v1090
    %v1182 = vunpack.c.l.b16 %v1091
    %v1183 = vunpack.c.h.b16 %v1091
    %v1184 = vunpack.c.l.b16 %v1092
    %v1185 = vunpack.c.h.b16 %v1092
    %v1186 = vunpack.c.l.b16 %v1093
    %v1187 = vunpack.c.h.b16 %v1093
    %v1188 = vunpack.c.l.b16 %v1094
    %v1189 = vunpack.c.h.b16 %v1094
    %v1190 = vunpack.c.l.b16 %v1095
    %v1191 = vunpack.c.h.b16 %v1095
    %v1192 = vunpack.c.l.b16 %v1096
    %v1193 = vunpack.c.h.b16 %v1096
    %v1194 = vunpack.c.l.b16 %v1097
    %v1195 = vunpack.c.h.b16 %v1097
    %v1196 = vunpack.c.l.b16 %v1098
    %v1197 = vunpack.c.h.b16 %v1098
    %v1198 = vunpack.c.l.b16 %v1099
    %v1199 = vunpack.c.h.b16 %v1099
    %v1200 = vunpack.c.l.b16 %v1100
    %v1201 = vunpack.c.h.b16 %v1100
    %v1202 = vunpack.c.l.b16 %v1101
    %v1203 = vunpack.c.h.b16 %v1101
    %v1204 = vunpack.c.l.b16 %v1102
    %v1205 = vunpack.c.h.b16 %v1102
    %v1206 = vunpack.c.l.b16 %v1103
    %v1207 = vunpack.c.h.b16 %v1103
    %v1208 = vunpack.c.l.b16 %v1104
    %v1209 = vunpack.c.h.b16 %v1104
    %v1210 = vunpack.c.l.b16 %v1105
    %v1211 = vunpack.c.h.b16 %v1105
    %v1212 = vunpack.c.l.b16 %v1106
    %v1213 = vunpack.c.h.b16 %v1106
    %v1214 = vunpack.c.l.b16 %v1107
    %v1215 = vunpack.c.h.b16 %v1107
    %v1216 = vunpack.c.l.b16 %v1108
    %v1217 = vunpack.c.h.b16 %v1108
    %v1218 = vpack.c.b16 %v1156, %v1154
    %v1219 = vpack.c.b16 %v1157, %v1155
    %v1220 = vpack.c.b16 %v1160, %v1158
    %v1221 = vpack.c.b16 %v1161, %v1159
    %v1222 = vpack.c.b16 %v1164, %v1162
    %v1223 = vpack.c.b16 %v1165, %v1163
    %v1224 = vpack.c.b16 %v1168, %v1166
    %v1225 = vpack.c.b16 %v1169, %v1167
    %v1226 = vpack.c.b16 %v1172, %v1170
    %v1227 = vpack.c.b16 %v1173, %v1171
    %v1228 = vpack.c.b16 %v1176, %v1174
    %v1229 = vpack.c.b16 %v1177, %v1175
    %v1230 = vpack.c.b16 %v1180, %v1178
    %v1231 = vpack.c.b16 %v1181, %v1179
    %v1232 = vpack.c.b16 %v1184, %v1182
    %v1233 = vpack.c.b16 %v1185, %v1183
    %v1234 = vpack.c.b16 %v1188, %v1186
    %v1235 = vpack.c.b16 %v1189, %v1187
    %v1236 = vpack.c.b16 %v1192, %v1190
    %v1237 = vpack.c.b16 %v1193, %v1191
    %v1238 = vpack.c.b16 %v1196, %v1194
    %v1239 = vpack.c.b16 %v1197, %v1195
    %v1240 = vpack.c.b16 %v1200, %v1198
    %v1241 = vpack.c.b16 %v1201, %v1199
    %v1242 = vpack.c.b16 %v1204, %v1202
    %v1243 = vpack.c.b16 %v1205, %v1203
    %v1244 = vpack.c.b16 %v1208, %v1206
    %v1245 = vpack.c.b16 %v1209, %v1207
    %v1246 = vpack.c.b16 %v1212, %v1210
    %v1247 = vpack.c.b16 %v1213, %v1211
    %v1248 = vpack.c.b16 %v1216, %v1214
    %v1249 = vpack.c.b16 %v1217, %v1215
    %1282 = vmatprep.subr.bf16.mxu0 %v1233
    %1283 = vmatpush1.bf16.msra.mxu0 %v1232
    %1284 = vmatprep.subr.bf16.mxu0 %v1231
    %1285 = vmatpush1.bf16.msra.mxu0 %v1230
    %1286 = vmatprep.subr.bf16.mxu0 %v1229
    %1287 = vmatpush1.bf16.msra.mxu0 %v1228
    %1288 = vmatprep.subr.bf16.mxu0 %v1227
    %1289 = vmatpush1.bf16.msra.mxu0 %v1226
    %1290 = vmatprep.subr.bf16.mxu0 %v1225
    %1291 = vmatpush1.bf16.msra.mxu0 %v1224
    %1292 = vmatprep.subr.bf16.mxu0 %v1223
    %1293 = vmatpush1.bf16.msra.mxu0 %v1222
    %1294 = vmatprep.subr.bf16.mxu0 %v1221
    %1295 = vmatpush1.bf16.msra.mxu0 %v1220
    %1296 = vmatprep.subr.bf16.mxu0 %v1219
    %1297 = vmatpush1.bf16.msra.mxu0 %v1218
    %1298 = vmatprep.subr.bf16.mxu0 %v1249
    %1299 = vmatpush2.bf16.msra.mxu0 %v1248
    %1300 = vmatprep.subr.bf16.mxu0 %v1247
    %1301 = vmatpush2.bf16.msra.mxu0 %v1246
    %1302 = vmatprep.subr.bf16.mxu0 %v1245
    %1303 = vmatpush2.bf16.msra.mxu0 %v1244
    %1304 = vmatprep.subr.bf16.mxu0 %v1243
    %1305 = vmatpush2.bf16.msra.mxu0 %v1242
    %1306 = vmatprep.subr.bf16.mxu0 %v1241
    %1307 = vmatpush2.bf16.msra.mxu0 %v1240
    %1308 = vmatprep.subr.bf16.mxu0 %v1239
    %1309 = vmatpush2.bf16.msra.mxu0 %v1238
    %1310 = vmatprep.subr.bf16.mxu0 %v1237
    %1311 = vmatpush2.bf16.msra.mxu0 %v1236
    %1312 = vmatprep.subr.bf16.mxu0 %v1235
    %1313 = vmatpush2.bf16.msra.mxu0 %v1234
    %1314 = vmatprep.mubr.bf16.mxu0 %v1045
    %1315 = vmatmul.mubr.bf16.gmra.mxu0 %v1044
    %v1316 = vpop.f32.mrf.mxu0
    %v1317 = vadd.f32 %v1115, %v1316
    %v1318 = vpop.f32.mrf.mxu0
    %v1319 = vadd.f32 %v1119, %v1318
    %v1320 = vpop.f32.mrf.mxu0
    %v1321 = vadd.f32 %v1115, %v1320
    %v1322 = vpop.f32.mrf.mxu0
    %v1323 = vadd.f32 %v1119, %v1322
    %1324 = vmatprep.mubr.bf16.mxu0 %v1047
    %1325 = vmatmul.mubr.bf16.gmra.mxu0 %v1046
    %v1326 = vpop.f32.mrf.mxu0
    %v1327 = vadd.f32 %v1115, %v1326
    %v1328 = vpop.f32.mrf.mxu0
    %v1329 = vadd.f32 %v1119, %v1328
    %v1330 = vpop.f32.mrf.mxu0
    %v1331 = vadd.f32 %v1115, %v1330
    %v1332 = vpop.f32.mrf.mxu0
    %v1333 = vadd.f32 %v1119, %v1332
    %1334 = vmatprep.mubr.bf16.mxu0 %v1049
    %1335 = vmatmul.mubr.bf16.gmra.mxu0 %v1048
    %v1336 = vpop.f32.mrf.mxu0
    %v1337 = vadd.f32 %v1115, %v1336
    %v1338 = vpop.f32.mrf.mxu0
    %v1339 = vadd.f32 %v1119, %v1338
    %v1340 = vpop.f32.mrf.mxu0
    %v1341 = vadd.f32 %v1115, %v1340
    %v1342 = vpop.f32.mrf.mxu0
    %v1343 = vadd.f32 %v1119, %v1342
    %1344 = vmatprep.mubr.bf16.mxu0 %v1051
    %1345 = vmatmul.mubr.bf16.gmra.mxu0 %v1050
    %v1346 = vpop.f32.mrf.mxu0
    %v1347 = vadd.f32 %v1115, %v1346
    %v1348 = vpop.f32.mrf.mxu0
    %v1349 = vadd.f32 %v1119, %v1348
    %v1350 = vpop.f32.mrf.mxu0
    %v1351 = vadd.f32 %v1115, %v1350
    %v1352 = vpop.f32.mrf.mxu0
    %v1353 = vadd.f32 %v1119, %v1352
    %1354 = vmatprep.mubr.bf16.mxu0 %v1053
    %1355 = vmatmul.mubr.bf16.gmra.mxu0 %v1052
    %v1356 = vpop.f32.mrf.mxu0
    %v1357 = vadd.f32 %v1115, %v1356
    %v1358 = vpop.f32.mrf.mxu0
    %v1359 = vadd.f32 %v1119, %v1358
    %v1360 = vpop.f32.mrf.mxu0
    %v1361 = vadd.f32 %v1115, %v1360
    %v1362 = vpop.f32.mrf.mxu0
    %v1363 = vadd.f32 %v1119, %v1362
    %1364 = vmatprep.mubr.bf16.mxu0 %v1055
    %1365 = vmatmul.mubr.bf16.gmra.mxu0 %v1054
    %v1366 = vpop.f32.mrf.mxu0
    %v1367 = vadd.f32 %v1115, %v1366
    %v1368 = vpop.f32.mrf.mxu0
    %v1369 = vadd.f32 %v1119, %v1368
    %v1370 = vpop.f32.mrf.mxu0
    %v1371 = vadd.f32 %v1115, %v1370
    %v1372 = vpop.f32.mrf.mxu0
    %v1373 = vadd.f32 %v1119, %v1372
    %1374 = vmatprep.mubr.bf16.mxu0 %v1057
    %1375 = vmatmul.mubr.bf16.gmra.mxu0 %v1056
    %v1376 = vpop.f32.mrf.mxu0
    %v1377 = vadd.f32 %v1115, %v1376
    %v1378 = vpop.f32.mrf.mxu0
    %v1379 = vadd.f32 %v1119, %v1378
    %v1380 = vpop.f32.mrf.mxu0
    %v1381 = vadd.f32 %v1115, %v1380
    %v1382 = vpop.f32.mrf.mxu0
    %v1383 = vadd.f32 %v1119, %v1382
    %1384 = vmatprep.mubr.bf16.mxu0 %v1059
    %1385 = vmatmul.mubr.bf16.gmra.mxu0 %v1058
    %v1386 = vpop.f32.mrf.mxu0
    %v1387 = vadd.f32 %v1115, %v1386
    %v1388 = vpop.f32.mrf.mxu0
    %v1389 = vadd.f32 %v1119, %v1388
    %v1390 = vpop.f32.mrf.mxu0
    %v1391 = vadd.f32 %v1115, %v1390
    %v1392 = vpop.f32.mrf.mxu0
    %v1393 = vadd.f32 %v1119, %v1392
    %1394 = vmatprep.mubr.bf16.mxu0 %v1061
    %1395 = vmatmul.mubr.bf16.gmra.mxu0 %v1060
    %v1396 = vpop.f32.mrf.mxu0
    %v1397 = vadd.f32 %v1115, %v1396
    %v1398 = vpop.f32.mrf.mxu0
    %v1399 = vadd.f32 %v1119, %v1398
    %v1400 = vpop.f32.mrf.mxu0
    %v1401 = vadd.f32 %v1115, %v1400
    %v1402 = vpop.f32.mrf.mxu0
    %v1403 = vadd.f32 %v1119, %v1402
    %1404 = vmatprep.mubr.bf16.mxu0 %v1063
    %1405 = vmatmul.mubr.bf16.gmra.mxu0 %v1062
    %v1406 = vpop.f32.mrf.mxu0
    %v1407 = vadd.f32 %v1115, %v1406
    %v1408 = vpop.f32.mrf.mxu0
    %v1409 = vadd.f32 %v1119, %v1408
    %v1410 = vpop.f32.mrf.mxu0
    %v1411 = vadd.f32 %v1115, %v1410
    %v1412 = vpop.f32.mrf.mxu0
    %v1413 = vadd.f32 %v1119, %v1412
    %1414 = vmatprep.mubr.bf16.mxu0 %v1065
    %1415 = vmatmul.mubr.bf16.gmra.mxu0 %v1064
    %v1416 = vpop.f32.mrf.mxu0
    %v1417 = vadd.f32 %v1115, %v1416
    %v1418 = vpop.f32.mrf.mxu0
    %v1419 = vadd.f32 %v1119, %v1418
    %v1420 = vpop.f32.mrf.mxu0
    %v1421 = vadd.f32 %v1115, %v1420
    %v1422 = vpop.f32.mrf.mxu0
    %v1423 = vadd.f32 %v1119, %v1422
    %1424 = vmatprep.mubr.bf16.mxu0 %v1067
    %1425 = vmatmul.mubr.bf16.gmra.mxu0 %v1066
    %v1426 = vpop.f32.mrf.mxu0
    %v1427 = vadd.f32 %v1115, %v1426
    %v1428 = vpop.f32.mrf.mxu0
    %v1429 = vadd.f32 %v1119, %v1428
    %v1430 = vpop.f32.mrf.mxu0
    %v1431 = vadd.f32 %v1115, %v1430
    %v1432 = vpop.f32.mrf.mxu0
    %v1433 = vadd.f32 %v1119, %v1432
    %1434 = vmatprep.mubr.bf16.mxu0 %v1069
    %1435 = vmatmul.mubr.bf16.gmra.mxu0 %v1068
    %v1436 = vpop.f32.mrf.mxu0
    %v1437 = vadd.f32 %v1115, %v1436
    %v1438 = vpop.f32.mrf.mxu0
    %v1439 = vadd.f32 %v1119, %v1438
    %v1440 = vpop.f32.mrf.mxu0
    %v1441 = vadd.f32 %v1115, %v1440
    %v1442 = vpop.f32.mrf.mxu0
    %v1443 = vadd.f32 %v1119, %v1442
    %1444 = vmatprep.mubr.bf16.mxu0 %v1071
    %1445 = vmatmul.mubr.bf16.gmra.mxu0 %v1070
    %v1446 = vpop.f32.mrf.mxu0
    %v1447 = vadd.f32 %v1115, %v1446
    %v1448 = vpop.f32.mrf.mxu0
    %v1449 = vadd.f32 %v1119, %v1448
    %v1450 = vpop.f32.mrf.mxu0
    %v1451 = vadd.f32 %v1115, %v1450
    %v1452 = vpop.f32.mrf.mxu0
    %v1453 = vadd.f32 %v1119, %v1452
    %1454 = vmatprep.mubr.bf16.mxu0 %v1073
    %1455 = vmatmul.mubr.bf16.gmra.mxu0 %v1072
    %v1456 = vpop.f32.mrf.mxu0
    %v1457 = vadd.f32 %v1115, %v1456
    %v1458 = vpop.f32.mrf.mxu0
    %v1459 = vadd.f32 %v1119, %v1458
    %v1460 = vpop.f32.mrf.mxu0
    %v1461 = vadd.f32 %v1115, %v1460
    %v1462 = vpop.f32.mrf.mxu0
    %v1463 = vadd.f32 %v1119, %v1462
    %1464 = vmatprep.mubr.bf16.mxu0 %v1075
    %1465 = vmatmul.mubr.bf16.gmra.mxu0 %v1074
    %v1466 = vpop.f32.mrf.mxu0
    %v1467 = vadd.f32 %v1115, %v1466
    %v1468 = vpop.f32.mrf.mxu0
    %v1469 = vadd.f32 %v1119, %v1468
    %v1470 = vpop.f32.mrf.mxu0
    %v1471 = vadd.f32 %v1115, %v1470
    %v1472 = vpop.f32.mrf.mxu0
    %v1473 = vadd.f32 %v1119, %v1472
    %1474 = vdwg.mxu0
    %v1475 = vmax.f32 %v1317, 0.0
    %v1476 = vmax.f32 %v1319, 0.0
    %v1477 = vmax.f32 %v1321, 0.0
    %v1478 = vmax.f32 %v1323, 0.0
    %v1479 = vmax.f32 %v1327, 0.0
    %v1480 = vmax.f32 %v1329, 0.0
    %v1481 = vmax.f32 %v1331, 0.0
    %v1482 = vmax.f32 %v1333, 0.0
    %v1483 = vmax.f32 %v1337, 0.0
    %v1484 = vmax.f32 %v1339, 0.0
    %v1485 = vmax.f32 %v1341, 0.0
    %v1486 = vmax.f32 %v1343, 0.0
    %v1487 = vmax.f32 %v1347, 0.0
    %v1488 = vmax.f32 %v1349, 0.0
    %v1489 = vmax.f32 %v1351, 0.0
    %v1490 = vmax.f32 %v1353, 0.0
    %v1491 = vmax.f32 %v1357, 0.0
    %v1492 = vmax.f32 %v1359, 0.0
    %v1493 = vmax.f32 %v1361, 0.0
    %v1494 = vmax.f32 %v1363, 0.0
    %v1495 = vmax.f32 %v1367, 0.0
    %v1496 = vmax.f32 %v1369, 0.0
    %v1497 = vmax.f32 %v1371, 0.0
    %v1498 = vmax.f32 %v1373, 0.0
    %v1499 = vmax.f32 %v1377, 0.0
    %v1500 = vmax.f32 %v1379, 0.0
    %v1501 = vmax.f32 %v1381, 0.0
    %v1502 = vmax.f32 %v1383, 0.0
    %v1503 = vmax.f32 %v1387, 0.0
    %v1504 = vmax.f32 %v1389, 0.0
    %v1505 = vmax.f32 %v1391, 0.0
    %v1506 = vmax.f32 %v1393, 0.0
    %v1507 = vmax.f32 %v1397, 0.0
    %v1508 = vmax.f32 %v1399, 0.0
    %v1509 = vmax.f32 %v1401, 0.0
    %v1510 = vmax.f32 %v1403, 0.0
    %v1511 = vmax.f32 %v1407, 0.0
    %v1512 = vmax.f32 %v1409, 0.0
    %v1513 = vmax.f32 %v1411, 0.0
    %v1514 = vmax.f32 %v1413, 0.0
    %v1515 = vmax.f32 %v1417, 0.0
    %v1516 = vmax.f32 %v1419, 0.0
    %v1517 = vmax.f32 %v1421, 0.0
    %v1518 = vmax.f32 %v1423, 0.0
    %v1519 = vmax.f32 %v1427, 0.0
    %v1520 = vmax.f32 %v1429, 0.0
    %v1521 = vmax.f32 %v1431, 0.0
    %v1522 = vmax.f32 %v1433, 0.0
    %v1523 = vmax.f32 %v1437, 0.0
    %v1524 = vmax.f32 %v1439, 0.0
    %v1525 = vmax.f32 %v1441, 0.0
    %v1526 = vmax.f32 %v1443, 0.0
    %v1527 = vmax.f32 %v1447, 0.0
    %v1528 = vmax.f32 %v1449, 0.0
    %v1529 = vmax.f32 %v1451, 0.0
    %v1530 = vmax.f32 %v1453, 0.0
    %v1531 = vmax.f32 %v1457, 0.0
    %v1532 = vmax.f32 %v1459, 0.0
    %v1533 = vmax.f32 %v1461, 0.0
    %v1534 = vmax.f32 %v1463, 0.0
    %v1535 = vmax.f32 %v1467, 0.0
    %v1536 = vmax.f32 %v1469, 0.0
    %v1537 = vmax.f32 %v1471, 0.0
    %v1538 = vmax.f32 %v1473, 0.0
    %v1539 = vpack.c.bf16 %v1477, %v1475
    %v1540 = vpack.c.bf16 %v1478, %v1476
    %v1541 = vpack.c.bf16 %v1481, %v1479
    %v1542 = vpack.c.bf16 %v1482, %v1480
    %v1543 = vpack.c.bf16 %v1485, %v1483
    %v1544 = vpack.c.bf16 %v1486, %v1484
    %v1545 = vpack.c.bf16 %v1489, %v1487
    %v1546 = vpack.c.bf16 %v1490, %v1488
    %v1547 = vpack.c.bf16 %v1493, %v1491
    %v1548 = vpack.c.bf16 %v1494, %v1492
    %v1549 = vpack.c.bf16 %v1497, %v1495
    %v1550 = vpack.c.bf16 %v1498, %v1496
    %v1551 = vpack.c.bf16 %v1501, %v1499
    %v1552 = vpack.c.bf16 %v1502, %v1500
    %v1553 = vpack.c.bf16 %v1505, %v1503
    %v1554 = vpack.c.bf16 %v1506, %v1504
    %v1555 = vpack.c.bf16 %v1509, %v1507
    %v1556 = vpack.c.bf16 %v1510, %v1508
    %v1557 = vpack.c.bf16 %v1513, %v1511
    %v1558 = vpack.c.bf16 %v1514, %v1512
    %v1559 = vpack.c.bf16 %v1517, %v1515
    %v1560 = vpack.c.bf16 %v1518, %v1516
    %v1561 = vpack.c.bf16 %v1521, %v1519
    %v1562 = vpack.c.bf16 %v1522, %v1520
    %v1563 = vpack.c.bf16 %v1525, %v1523
    %v1564 = vpack.c.bf16 %v1526, %v1524
    %v1565 = vpack.c.bf16 %v1529, %v1527
    %v1566 = vpack.c.bf16 %v1530, %v1528
    %v1567 = vpack.c.bf16 %v1533, %v1531
    %v1568 = vpack.c.bf16 %v1534, %v1532
    %v1569 = vpack.c.bf16 %v1537, %v1535
    %v1570 = vpack.c.bf16 %v1538, %v1536
    %s1571 = scalar_lea.vmem [#allocation5], 768
    %v1572 = vld [vmem:[%s1571] sm:$0xff]
    %v1573 = vld [vmem:[%s1571 + $0x8] sm:$0xff]
    %v1574 = vld [vmem:[%s1571 + $0x10] sm:$0xff]
    %v1575 = vld [vmem:[%s1571 + $0x18] sm:$0xff]
    %v1576 = vld [vmem:[%s1571 + $0x20] sm:$0xff]
    %v1577 = vld [vmem:[%s1571 + $0x28] sm:$0xff]
    %v1578 = vld [vmem:[%s1571 + $0x30] sm:$0xff]
    %v1579 = vld [vmem:[%s1571 + $0x38] sm:$0xff]
    %v1580 = vld [vmem:[%s1571 + $0x40] sm:$0xff]
    %v1581 = vld [vmem:[%s1571 + $0x48] sm:$0xff]
    %v1582 = vld [vmem:[%s1571 + $0x50] sm:$0xff]
    %v1583 = vld [vmem:[%s1571 + $0x58] sm:$0xff]
    %v1584 = vld [vmem:[%s1571 + $0x60] sm:$0xff]
    %v1585 = vld [vmem:[%s1571 + $0x68] sm:$0xff]
    %v1586 = vld [vmem:[%s1571 + $0x70] sm:$0xff]
    %v1587 = vld [vmem:[%s1571 + $0x78] sm:$0xff]
    %v1588 = vld [vmem:[%s1571 + $0x80] sm:$0xff]
    %v1589 = vld [vmem:[%s1571 + $0x88] sm:$0xff]
    %v1590 = vld [vmem:[%s1571 + $0x90] sm:$0xff]
    %v1591 = vld [vmem:[%s1571 + $0x98] sm:$0xff]
    %v1592 = vld [vmem:[%s1571 + $0xa0] sm:$0xff]
    %v1593 = vld [vmem:[%s1571 + $0xa8] sm:$0xff]
    %v1594 = vld [vmem:[%s1571 + $0xb0] sm:$0xff]
    %v1595 = vld [vmem:[%s1571 + $0xb8] sm:$0xff]
    %v1596 = vld [vmem:[%s1571 + $0xc0] sm:$0xff]
    %v1597 = vld [vmem:[%s1571 + $0xc8] sm:$0xff]
    %v1598 = vld [vmem:[%s1571 + $0xd0] sm:$0xff]
    %v1599 = vld [vmem:[%s1571 + $0xd8] sm:$0xff]
    %v1600 = vld [vmem:[%s1571 + $0xe0] sm:$0xff]
    %v1601 = vld [vmem:[%s1571 + $0xe8] sm:$0xff]
    %v1602 = vld [vmem:[%s1571 + $0xf0] sm:$0xff]
    %v1603 = vld [vmem:[%s1571 + $0xf8] sm:$0xff]
    %s1604 = scalar_lea.vmem [#allocation7], 6
    %v1605 = vld [vmem:[%s1604] sm:$0x3]
    %v1607 = vlaneseq
    %v1608 = vshrl.u32 %v1607, 7
    %v1609 = vsub.s32 0, %v1608
    %v1610 = vrot.slane %v1605, %v1609
    %v1611 = vlaneseq
    %v1612 = vshrl.u32 %v1611, 7
    %v1613 = vsub.s32 1, %v1612
    %v1614 = vrot.slane %v1605, %v1613
    %v1649 = vunpack.c.l.b16 %v1572
    %v1650 = vunpack.c.h.b16 %v1572
    %v1651 = vunpack.c.l.b16 %v1573
    %v1652 = vunpack.c.h.b16 %v1573
    %v1653 = vunpack.c.l.b16 %v1574
    %v1654 = vunpack.c.h.b16 %v1574
    %v1655 = vunpack.c.l.b16 %v1575
    %v1656 = vunpack.c.h.b16 %v1575
    %v1657 = vunpack.c.l.b16 %v1576
    %v1658 = vunpack.c.h.b16 %v1576
    %v1659 = vunpack.c.l.b16 %v1577
    %v1660 = vunpack.c.h.b16 %v1577
    %v1661 = vunpack.c.l.b16 %v1578
    %v1662 = vunpack.c.h.b16 %v1578
    %v1663 = vunpack.c.l.b16 %v1579
    %v1664 = vunpack.c.h.b16 %v1579
    %v1665 = vunpack.c.l.b16 %v1580
    %v1666 = vunpack.c.h.b16 %v1580
    %v1667 = vunpack.c.l.b16 %v1581
    %v1668 = vunpack.c.h.b16 %v1581
    %v1669 = vunpack.c.l.b16 %v1582
    %v1670 = vunpack.c.h.b16 %v1582
    %v1671 = vunpack.c.l.b16 %v1583
    %v1672 = vunpack.c.h.b16 %v1583
    %v1673 = vunpack.c.l.b16 %v1584
    %v1674 = vunpack.c.h.b16 %v1584
    %v1675 = vunpack.c.l.b16 %v1585
    %v1676 = vunpack.c.h.b16 %v1585
    %v1677 = vunpack.c.l.b16 %v1586
    %v1678 = vunpack.c.h.b16 %v1586
    %v1679 = vunpack.c.l.b16 %v1587
    %v1680 = vunpack.c.h.b16 %v1587
    %v1681 = vunpack.c.l.b16 %v1588
    %v1682 = vunpack.c.h.b16 %v1588
    %v1683 = vunpack.c.l.b16 %v1589
    %v1684 = vunpack.c.h.b16 %v1589
    %v1685 = vunpack.c.l.b16 %v1590
    %v1686 = vunpack.c.h.b16 %v1590
    %v1687 = vunpack.c.l.b16 %v1591
    %v1688 = vunpack.c.h.b16 %v1591
    %v1689 = vunpack.c.l.b16 %v1592
    %v1690 = vunpack.c.h.b16 %v1592
    %v1691 = vunpack.c.l.b16 %v1593
    %v1692 = vunpack.c.h.b16 %v1593
    %v1693 = vunpack.c.l.b16 %v1594
    %v1694 = vunpack.c.h.b16 %v1594
    %v1695 = vunpack.c.l.b16 %v1595
    %v1696 = vunpack.c.h.b16 %v1595
    %v1697 = vunpack.c.l.b16 %v1596
    %v1698 = vunpack.c.h.b16 %v1596
    %v1699 = vunpack.c.l.b16 %v1597
    %v1700 = vunpack.c.h.b16 %v1597
    %v1701 = vunpack.c.l.b16 %v1598
    %v1702 = vunpack.c.h.b16 %v1598
    %v1703 = vunpack.c.l.b16 %v1599
    %v1704 = vunpack.c.h.b16 %v1599
    %v1705 = vunpack.c.l.b16 %v1600
    %v1706 = vunpack.c.h.b16 %v1600
    %v1707 = vunpack.c.l.b16 %v1601
    %v1708 = vunpack.c.h.b16 %v1601
    %v1709 = vunpack.c.l.b16 %v1602
    %v1710 = vunpack.c.h.b16 %v1602
    %v1711 = vunpack.c.l.b16 %v1603
    %v1712 = vunpack.c.h.b16 %v1603
    %v1713 = vpack.c.b16 %v1651, %v1649
    %v1714 = vpack.c.b16 %v1652, %v1650
    %v1715 = vpack.c.b16 %v1655, %v1653
    %v1716 = vpack.c.b16 %v1656, %v1654
    %v1717 = vpack.c.b16 %v1659, %v1657
    %v1718 = vpack.c.b16 %v1660, %v1658
    %v1719 = vpack.c.b16 %v1663, %v1661
    %v1720 = vpack.c.b16 %v1664, %v1662
    %v1721 = vpack.c.b16 %v1667, %v1665
    %v1722 = vpack.c.b16 %v1668, %v1666
    %v1723 = vpack.c.b16 %v1671, %v1669
    %v1724 = vpack.c.b16 %v1672, %v1670
    %v1725 = vpack.c.b16 %v1675, %v1673
    %v1726 = vpack.c.b16 %v1676, %v1674
    %v1727 = vpack.c.b16 %v1679, %v1677
    %v1728 = vpack.c.b16 %v1680, %v1678
    %v1729 = vpack.c.b16 %v1683, %v1681
    %v1730 = vpack.c.b16 %v1684, %v1682
    %v1731 = vpack.c.b16 %v1687, %v1685
    %v1732 = vpack.c.b16 %v1688, %v1686
    %v1733 = vpack.c.b16 %v1691, %v1689
    %v1734 = vpack.c.b16 %v1692, %v1690
    %v1735 = vpack.c.b16 %v1695, %v1693
    %v1736 = vpack.c.b16 %v1696, %v1694
    %v1737 = vpack.c.b16 %v1699, %v1697
    %v1738 = vpack.c.b16 %v1700, %v1698
    %v1739 = vpack.c.b16 %v1703, %v1701
    %v1740 = vpack.c.b16 %v1704, %v1702
    %v1741 = vpack.c.b16 %v1707, %v1705
    %v1742 = vpack.c.b16 %v1708, %v1706
    %v1743 = vpack.c.b16 %v1711, %v1709
    %v1744 = vpack.c.b16 %v1712, %v1710
    %1777 = vmatprep.subr.bf16.mxu0 %v1728
    %1778 = vmatpush1.bf16.msra.mxu0 %v1727
    %1779 = vmatprep.subr.bf16.mxu0 %v1726
    %1780 = vmatpush1.bf16.msra.mxu0 %v1725
    %1781 = vmatprep.subr.bf16.mxu0 %v1724
    %1782 = vmatpush1.bf16.msra.mxu0 %v1723
    %1783 = vmatprep.subr.bf16.mxu0 %v1722
    %1784 = vmatpush1.bf16.msra.mxu0 %v1721
    %1785 = vmatprep.subr.bf16.mxu0 %v1720
    %1786 = vmatpush1.bf16.msra.mxu0 %v1719
    %1787 = vmatprep.subr.bf16.mxu0 %v1718
    %1788 = vmatpush1.bf16.msra.mxu0 %v1717
    %1789 = vmatprep.subr.bf16.mxu0 %v1716
    %1790 = vmatpush1.bf16.msra.mxu0 %v1715
    %1791 = vmatprep.subr.bf16.mxu0 %v1714
    %1792 = vmatpush1.bf16.msra.mxu0 %v1713
    %1793 = vmatprep.subr.bf16.mxu0 %v1744
    %1794 = vmatpush2.bf16.msra.mxu0 %v1743
    %1795 = vmatprep.subr.bf16.mxu0 %v1742
    %1796 = vmatpush2.bf16.msra.mxu0 %v1741
    %1797 = vmatprep.subr.bf16.mxu0 %v1740
    %1798 = vmatpush2.bf16.msra.mxu0 %v1739
    %1799 = vmatprep.subr.bf16.mxu0 %v1738
    %1800 = vmatpush2.bf16.msra.mxu0 %v1737
    %1801 = vmatprep.subr.bf16.mxu0 %v1736
    %1802 = vmatpush2.bf16.msra.mxu0 %v1735
    %1803 = vmatprep.subr.bf16.mxu0 %v1734
    %1804 = vmatpush2.bf16.msra.mxu0 %v1733
    %1805 = vmatprep.subr.bf16.mxu0 %v1732
    %1806 = vmatpush2.bf16.msra.mxu0 %v1731
    %1807 = vmatprep.subr.bf16.mxu0 %v1730
    %1808 = vmatpush2.bf16.msra.mxu0 %v1729
    %1809 = vmatprep.mubr.bf16.mxu0 %v1540
    %1810 = vmatmul.mubr.bf16.gmra.mxu0 %v1539
    %v1811 = vpop.f32.mrf.mxu0
    %v1812 = vadd.f32 %v1610, %v1811
    %v1813 = vpop.f32.mrf.mxu0
    %v1814 = vadd.f32 %v1614, %v1813
    %v1815 = vpop.f32.mrf.mxu0
    %v1816 = vadd.f32 %v1610, %v1815
    %v1817 = vpop.f32.mrf.mxu0
    %v1818 = vadd.f32 %v1614, %v1817
    %1819 = vmatprep.mubr.bf16.mxu0 %v1542
    %1820 = vmatmul.mubr.bf16.gmra.mxu0 %v1541
    %v1821 = vpop.f32.mrf.mxu0
    %v1822 = vadd.f32 %v1610, %v1821
    %v1823 = vpop.f32.mrf.mxu0
    %v1824 = vadd.f32 %v1614, %v1823
    %v1825 = vpop.f32.mrf.mxu0
    %v1826 = vadd.f32 %v1610, %v1825
    %v1827 = vpop.f32.mrf.mxu0
    %v1828 = vadd.f32 %v1614, %v1827
    %1829 = vmatprep.mubr.bf16.mxu0 %v1544
    %1830 = vmatmul.mubr.bf16.gmra.mxu0 %v1543
    %v1831 = vpop.f32.mrf.mxu0
    %v1832 = vadd.f32 %v1610, %v1831
    %v1833 = vpop.f32.mrf.mxu0
    %v1834 = vadd.f32 %v1614, %v1833
    %v1835 = vpop.f32.mrf.mxu0
    %v1836 = vadd.f32 %v1610, %v1835
    %v1837 = vpop.f32.mrf.mxu0
    %v1838 = vadd.f32 %v1614, %v1837
    %1839 = vmatprep.mubr.bf16.mxu0 %v1546
    %1840 = vmatmul.mubr.bf16.gmra.mxu0 %v1545
    %v1841 = vpop.f32.mrf.mxu0
    %v1842 = vadd.f32 %v1610, %v1841
    %v1843 = vpop.f32.mrf.mxu0
    %v1844 = vadd.f32 %v1614, %v1843
    %v1845 = vpop.f32.mrf.mxu0
    %v1846 = vadd.f32 %v1610, %v1845
    %v1847 = vpop.f32.mrf.mxu0
    %v1848 = vadd.f32 %v1614, %v1847
    %1849 = vmatprep.mubr.bf16.mxu0 %v1548
    %1850 = vmatmul.mubr.bf16.gmra.mxu0 %v1547
    %v1851 = vpop.f32.mrf.mxu0
    %v1852 = vadd.f32 %v1610, %v1851
    %v1853 = vpop.f32.mrf.mxu0
    %v1854 = vadd.f32 %v1614, %v1853
    %v1855 = vpop.f32.mrf.mxu0
    %v1856 = vadd.f32 %v1610, %v1855
    %v1857 = vpop.f32.mrf.mxu0
    %v1858 = vadd.f32 %v1614, %v1857
    %1859 = vmatprep.mubr.bf16.mxu0 %v1550
    %1860 = vmatmul.mubr.bf16.gmra.mxu0 %v1549
    %v1861 = vpop.f32.mrf.mxu0
    %v1862 = vadd.f32 %v1610, %v1861
    %v1863 = vpop.f32.mrf.mxu0
    %v1864 = vadd.f32 %v1614, %v1863
    %v1865 = vpop.f32.mrf.mxu0
    %v1866 = vadd.f32 %v1610, %v1865
    %v1867 = vpop.f32.mrf.mxu0
    %v1868 = vadd.f32 %v1614, %v1867
    %1869 = vmatprep.mubr.bf16.mxu0 %v1552
    %1870 = vmatmul.mubr.bf16.gmra.mxu0 %v1551
    %v1871 = vpop.f32.mrf.mxu0
    %v1872 = vadd.f32 %v1610, %v1871
    %v1873 = vpop.f32.mrf.mxu0
    %v1874 = vadd.f32 %v1614, %v1873
    %v1875 = vpop.f32.mrf.mxu0
    %v1876 = vadd.f32 %v1610, %v1875
    %v1877 = vpop.f32.mrf.mxu0
    %v1878 = vadd.f32 %v1614, %v1877
    %1879 = vmatprep.mubr.bf16.mxu0 %v1554
    %1880 = vmatmul.mubr.bf16.gmra.mxu0 %v1553
    %v1881 = vpop.f32.mrf.mxu0
    %v1882 = vadd.f32 %v1610, %v1881
    %v1883 = vpop.f32.mrf.mxu0
    %v1884 = vadd.f32 %v1614, %v1883
    %v1885 = vpop.f32.mrf.mxu0
    %v1886 = vadd.f32 %v1610, %v1885
    %v1887 = vpop.f32.mrf.mxu0
    %v1888 = vadd.f32 %v1614, %v1887
    %1889 = vmatprep.mubr.bf16.mxu0 %v1556
    %1890 = vmatmul.mubr.bf16.gmra.mxu0 %v1555
    %v1891 = vpop.f32.mrf.mxu0
    %v1892 = vadd.f32 %v1610, %v1891
    %v1893 = vpop.f32.mrf.mxu0
    %v1894 = vadd.f32 %v1614, %v1893
    %v1895 = vpop.f32.mrf.mxu0
    %v1896 = vadd.f32 %v1610, %v1895
    %v1897 = vpop.f32.mrf.mxu0
    %v1898 = vadd.f32 %v1614, %v1897
    %1899 = vmatprep.mubr.bf16.mxu0 %v1558
    %1900 = vmatmul.mubr.bf16.gmra.mxu0 %v1557
    %v1901 = vpop.f32.mrf.mxu0
    %v1902 = vadd.f32 %v1610, %v1901
    %v1903 = vpop.f32.mrf.mxu0
    %v1904 = vadd.f32 %v1614, %v1903
    %v1905 = vpop.f32.mrf.mxu0
    %v1906 = vadd.f32 %v1610, %v1905
    %v1907 = vpop.f32.mrf.mxu0
    %v1908 = vadd.f32 %v1614, %v1907
    %1909 = vmatprep.mubr.bf16.mxu0 %v1560
    %1910 = vmatmul.mubr.bf16.gmra.mxu0 %v1559
    %v1911 = vpop.f32.mrf.mxu0
    %v1912 = vadd.f32 %v1610, %v1911
    %v1913 = vpop.f32.mrf.mxu0
    %v1914 = vadd.f32 %v1614, %v1913
    %v1915 = vpop.f32.mrf.mxu0
    %v1916 = vadd.f32 %v1610, %v1915
    %v1917 = vpop.f32.mrf.mxu0
    %v1918 = vadd.f32 %v1614, %v1917
    %1919 = vmatprep.mubr.bf16.mxu0 %v1562
    %1920 = vmatmul.mubr.bf16.gmra.mxu0 %v1561
    %v1921 = vpop.f32.mrf.mxu0
    %v1922 = vadd.f32 %v1610, %v1921
    %v1923 = vpop.f32.mrf.mxu0
    %v1924 = vadd.f32 %v1614, %v1923
    %v1925 = vpop.f32.mrf.mxu0
    %v1926 = vadd.f32 %v1610, %v1925
    %v1927 = vpop.f32.mrf.mxu0
    %v1928 = vadd.f32 %v1614, %v1927
    %1929 = vmatprep.mubr.bf16.mxu0 %v1564
    %1930 = vmatmul.mubr.bf16.gmra.mxu0 %v1563
    %v1931 = vpop.f32.mrf.mxu0
    %v1932 = vadd.f32 %v1610, %v1931
    %v1933 = vpop.f32.mrf.mxu0
    %v1934 = vadd.f32 %v1614, %v1933
    %v1935 = vpop.f32.mrf.mxu0
    %v1936 = vadd.f32 %v1610, %v1935
    %v1937 = vpop.f32.mrf.mxu0
    %v1938 = vadd.f32 %v1614, %v1937
    %1939 = vmatprep.mubr.bf16.mxu0 %v1566
    %1940 = vmatmul.mubr.bf16.gmra.mxu0 %v1565
    %v1941 = vpop.f32.mrf.mxu0
    %v1942 = vadd.f32 %v1610, %v1941
    %v1943 = vpop.f32.mrf.mxu0
    %v1944 = vadd.f32 %v1614, %v1943
    %v1945 = vpop.f32.mrf.mxu0
    %v1946 = vadd.f32 %v1610, %v1945
    %v1947 = vpop.f32.mrf.mxu0
    %v1948 = vadd.f32 %v1614, %v1947
    %1949 = vmatprep.mubr.bf16.mxu0 %v1568
    %1950 = vmatmul.mubr.bf16.gmra.mxu0 %v1567
    %v1951 = vpop.f32.mrf.mxu0
    %v1952 = vadd.f32 %v1610, %v1951
    %v1953 = vpop.f32.mrf.mxu0
    %v1954 = vadd.f32 %v1614, %v1953
    %v1955 = vpop.f32.mrf.mxu0
    %v1956 = vadd.f32 %v1610, %v1955
    %v1957 = vpop.f32.mrf.mxu0
    %v1958 = vadd.f32 %v1614, %v1957
    %1959 = vmatprep.mubr.bf16.mxu0 %v1570
    %1960 = vmatmul.mubr.bf16.gmra.mxu0 %v1569
    %v1961 = vpop.f32.mrf.mxu0
    %v1962 = vadd.f32 %v1610, %v1961
    %v1963 = vpop.f32.mrf.mxu0
    %v1964 = vadd.f32 %v1614, %v1963
    %v1965 = vpop.f32.mrf.mxu0
    %v1966 = vadd.f32 %v1610, %v1965
    %v1967 = vpop.f32.mrf.mxu0
    %v1968 = vadd.f32 %v1614, %v1967
    %1969 = vdwg.mxu0
    %v1970 = vmax.f32 %v1812, 0.0
    %v1971 = vmax.f32 %v1814, 0.0
    %v1972 = vmax.f32 %v1816, 0.0
    %v1973 = vmax.f32 %v1818, 0.0
    %v1974 = vmax.f32 %v1822, 0.0
    %v1975 = vmax.f32 %v1824, 0.0
    %v1976 = vmax.f32 %v1826, 0.0
    %v1977 = vmax.f32 %v1828, 0.0
    %v1978 = vmax.f32 %v1832, 0.0
    %v1979 = vmax.f32 %v1834, 0.0
    %v1980 = vmax.f32 %v1836, 0.0
    %v1981 = vmax.f32 %v1838, 0.0
    %v1982 = vmax.f32 %v1842, 0.0
    %v1983 = vmax.f32 %v1844, 0.0
    %v1984 = vmax.f32 %v1846, 0.0
    %v1985 = vmax.f32 %v1848, 0.0
    %v1986 = vmax.f32 %v1852, 0.0
    %v1987 = vmax.f32 %v1854, 0.0
    %v1988 = vmax.f32 %v1856, 0.0
    %v1989 = vmax.f32 %v1858, 0.0
    %v1990 = vmax.f32 %v1862, 0.0
    %v1991 = vmax.f32 %v1864, 0.0
    %v1992 = vmax.f32 %v1866, 0.0
    %v1993 = vmax.f32 %v1868, 0.0
    %v1994 = vmax.f32 %v1872, 0.0
    %v1995 = vmax.f32 %v1874, 0.0
    %v1996 = vmax.f32 %v1876, 0.0
    %v1997 = vmax.f32 %v1878, 0.0
    %v1998 = vmax.f32 %v1882, 0.0
    %v1999 = vmax.f32 %v1884, 0.0
    %v2000 = vmax.f32 %v1886, 0.0
    %v2001 = vmax.f32 %v1888, 0.0
    %v2002 = vmax.f32 %v1892, 0.0
    %v2003 = vmax.f32 %v1894, 0.0
    %v2004 = vmax.f32 %v1896, 0.0
    %v2005 = vmax.f32 %v1898, 0.0
    %v2006 = vmax.f32 %v1902, 0.0
    %v2007 = vmax.f32 %v1904, 0.0
    %v2008 = vmax.f32 %v1906, 0.0
    %v2009 = vmax.f32 %v1908, 0.0
    %v2010 = vmax.f32 %v1912, 0.0
    %v2011 = vmax.f32 %v1914, 0.0
    %v2012 = vmax.f32 %v1916, 0.0
    %v2013 = vmax.f32 %v1918, 0.0
    %v2014 = vmax.f32 %v1922, 0.0
    %v2015 = vmax.f32 %v1924, 0.0
    %v2016 = vmax.f32 %v1926, 0.0
    %v2017 = vmax.f32 %v1928, 0.0
    %v2018 = vmax.f32 %v1932, 0.0
    %v2019 = vmax.f32 %v1934, 0.0
    %v2020 = vmax.f32 %v1936, 0.0
    %v2021 = vmax.f32 %v1938, 0.0
    %v2022 = vmax.f32 %v1942, 0.0
    %v2023 = vmax.f32 %v1944, 0.0
    %v2024 = vmax.f32 %v1946, 0.0
    %v2025 = vmax.f32 %v1948, 0.0
    %v2026 = vmax.f32 %v1952, 0.0
    %v2027 = vmax.f32 %v1954, 0.0
    %v2028 = vmax.f32 %v1956, 0.0
    %v2029 = vmax.f32 %v1958, 0.0
    %v2030 = vmax.f32 %v1962, 0.0
    %v2031 = vmax.f32 %v1964, 0.0
    %v2032 = vmax.f32 %v1966, 0.0
    %v2033 = vmax.f32 %v1968, 0.0
    %v2034 = vpack.c.bf16 %v1972, %v1970
    %v2035 = vpack.c.bf16 %v1973, %v1971
    %v2036 = vpack.c.bf16 %v1976, %v1974
    %v2037 = vpack.c.bf16 %v1977, %v1975
    %v2038 = vpack.c.bf16 %v1980, %v1978
    %v2039 = vpack.c.bf16 %v1981, %v1979
    %v2040 = vpack.c.bf16 %v1984, %v1982
    %v2041 = vpack.c.bf16 %v1985, %v1983
    %v2042 = vpack.c.bf16 %v1988, %v1986
    %v2043 = vpack.c.bf16 %v1989, %v1987
    %v2044 = vpack.c.bf16 %v1992, %v1990
    %v2045 = vpack.c.bf16 %v1993, %v1991
    %v2046 = vpack.c.bf16 %v1996, %v1994
    %v2047 = vpack.c.bf16 %v1997, %v1995
    %v2048 = vpack.c.bf16 %v2000, %v1998
    %v2049 = vpack.c.bf16 %v2001, %v1999
    %v2050 = vpack.c.bf16 %v2004, %v2002
    %v2051 = vpack.c.bf16 %v2005, %v2003
    %v2052 = vpack.c.bf16 %v2008, %v2006
    %v2053 = vpack.c.bf16 %v2009, %v2007
    %v2054 = vpack.c.bf16 %v2012, %v2010
    %v2055 = vpack.c.bf16 %v2013, %v2011
    %v2056 = vpack.c.bf16 %v2016, %v2014
    %v2057 = vpack.c.bf16 %v2017, %v2015
    %v2058 = vpack.c.bf16 %v2020, %v2018
    %v2059 = vpack.c.bf16 %v2021, %v2019
    %v2060 = vpack.c.bf16 %v2024, %v2022
    %v2061 = vpack.c.bf16 %v2025, %v2023
    %v2062 = vpack.c.bf16 %v2028, %v2026
    %v2063 = vpack.c.bf16 %v2029, %v2027
    %v2064 = vpack.c.bf16 %v2032, %v2030
    %v2065 = vpack.c.bf16 %v2033, %v2031
    %s2066 = scalar_lea.vmem [#allocation5], 1024
    %v2067 = vld [vmem:[%s2066] sm:$0xff]
    %v2068 = vld [vmem:[%s2066 + $0x8] sm:$0xff]
    %v2069 = vld [vmem:[%s2066 + $0x10] sm:$0xff]
    %v2070 = vld [vmem:[%s2066 + $0x18] sm:$0xff]
    %v2071 = vld [vmem:[%s2066 + $0x20] sm:$0xff]
    %v2072 = vld [vmem:[%s2066 + $0x28] sm:$0xff]
    %v2073 = vld [vmem:[%s2066 + $0x30] sm:$0xff]
    %v2074 = vld [vmem:[%s2066 + $0x38] sm:$0xff]
    %v2075 = vld [vmem:[%s2066 + $0x40] sm:$0xff]
    %v2076 = vld [vmem:[%s2066 + $0x48] sm:$0xff]
    %v2077 = vld [vmem:[%s2066 + $0x50] sm:$0xff]
    %v2078 = vld [vmem:[%s2066 + $0x58] sm:$0xff]
    %v2079 = vld [vmem:[%s2066 + $0x60] sm:$0xff]
    %v2080 = vld [vmem:[%s2066 + $0x68] sm:$0xff]
    %v2081 = vld [vmem:[%s2066 + $0x70] sm:$0xff]
    %v2082 = vld [vmem:[%s2066 + $0x78] sm:$0xff]
    %v2083 = vld [vmem:[%s2066 + $0x80] sm:$0xff]
    %v2084 = vld [vmem:[%s2066 + $0x88] sm:$0xff]
    %v2085 = vld [vmem:[%s2066 + $0x90] sm:$0xff]
    %v2086 = vld [vmem:[%s2066 + $0x98] sm:$0xff]
    %v2087 = vld [vmem:[%s2066 + $0xa0] sm:$0xff]
    %v2088 = vld [vmem:[%s2066 + $0xa8] sm:$0xff]
    %v2089 = vld [vmem:[%s2066 + $0xb0] sm:$0xff]
    %v2090 = vld [vmem:[%s2066 + $0xb8] sm:$0xff]
    %v2091 = vld [vmem:[%s2066 + $0xc0] sm:$0xff]
    %v2092 = vld [vmem:[%s2066 + $0xc8] sm:$0xff]
    %v2093 = vld [vmem:[%s2066 + $0xd0] sm:$0xff]
    %v2094 = vld [vmem:[%s2066 + $0xd8] sm:$0xff]
    %v2095 = vld [vmem:[%s2066 + $0xe0] sm:$0xff]
    %v2096 = vld [vmem:[%s2066 + $0xe8] sm:$0xff]
    %v2097 = vld [vmem:[%s2066 + $0xf0] sm:$0xff]
    %v2098 = vld [vmem:[%s2066 + $0xf8] sm:$0xff]
    %s2099 = scalar_lea.vmem [#allocation7], 8
    %v2100 = vld [vmem:[%s2099] sm:$0x3]
    %v2102 = vlaneseq
    %v2103 = vshrl.u32 %v2102, 7
    %v2104 = vsub.s32 0, %v2103
    %v2105 = vrot.slane %v2100, %v2104
    %v2106 = vlaneseq
    %v2107 = vshrl.u32 %v2106, 7
    %v2108 = vsub.s32 1, %v2107
    %v2109 = vrot.slane %v2100, %v2108
    %v2144 = vunpack.c.l.b16 %v2067
    %v2145 = vunpack.c.h.b16 %v2067
    %v2146 = vunpack.c.l.b16 %v2068
    %v2147 = vunpack.c.h.b16 %v2068
    %v2148 = vunpack.c.l.b16 %v2069
    %v2149 = vunpack.c.h.b16 %v2069
    %v2150 = vunpack.c.l.b16 %v2070
    %v2151 = vunpack.c.h.b16 %v2070
    %v2152 = vunpack.c.l.b16 %v2071
    %v2153 = vunpack.c.h.b16 %v2071
    %v2154 = vunpack.c.l.b16 %v2072
    %v2155 = vunpack.c.h.b16 %v2072
    %v2156 = vunpack.c.l.b16 %v2073
    %v2157 = vunpack.c.h.b16 %v2073
    %v2158 = vunpack.c.l.b16 %v2074
    %v2159 = vunpack.c.h.b16 %v2074
    %v2160 = vunpack.c.l.b16 %v2075
    %v2161 = vunpack.c.h.b16 %v2075
    %v2162 = vunpack.c.l.b16 %v2076
    %v2163 = vunpack.c.h.b16 %v2076
    %v2164 = vunpack.c.l.b16 %v2077
    %v2165 = vunpack.c.h.b16 %v2077
    %v2166 = vunpack.c.l.b16 %v2078
    %v2167 = vunpack.c.h.b16 %v2078
    %v2168 = vunpack.c.l.b16 %v2079
    %v2169 = vunpack.c.h.b16 %v2079
    %v2170 = vunpack.c.l.b16 %v2080
    %v2171 = vunpack.c.h.b16 %v2080
    %v2172 = vunpack.c.l.b16 %v2081
    %v2173 = vunpack.c.h.b16 %v2081
    %v2174 = vunpack.c.l.b16 %v2082
    %v2175 = vunpack.c.h.b16 %v2082
    %v2176 = vunpack.c.l.b16 %v2083
    %v2177 = vunpack.c.h.b16 %v2083
    %v2178 = vunpack.c.l.b16 %v2084
    %v2179 = vunpack.c.h.b16 %v2084
    %v2180 = vunpack.c.l.b16 %v2085
    %v2181 = vunpack.c.h.b16 %v2085
    %v2182 = vunpack.c.l.b16 %v2086
    %v2183 = vunpack.c.h.b16 %v2086
    %v2184 = vunpack.c.l.b16 %v2087
    %v2185 = vunpack.c.h.b16 %v2087
    %v2186 = vunpack.c.l.b16 %v2088
    %v2187 = vunpack.c.h.b16 %v2088
    %v2188 = vunpack.c.l.b16 %v2089
    %v2189 = vunpack.c.h.b16 %v2089
    %v2190 = vunpack.c.l.b16 %v2090
    %v2191 = vunpack.c.h.b16 %v2090
    %v2192 = vunpack.c.l.b16 %v2091
    %v2193 = vunpack.c.h.b16 %v2091
    %v2194 = vunpack.c.l.b16 %v2092
    %v2195 = vunpack.c.h.b16 %v2092
    %v2196 = vunpack.c.l.b16 %v2093
    %v2197 = vunpack.c.h.b16 %v2093
    %v2198 = vunpack.c.l.b16 %v2094
    %v2199 = vunpack.c.h.b16 %v2094
    %v2200 = vunpack.c.l.b16 %v2095
    %v2201 = vunpack.c.h.b16 %v2095
    %v2202 = vunpack.c.l.b16 %v2096
    %v2203 = vunpack.c.h.b16 %v2096
    %v2204 = vunpack.c.l.b16 %v2097
    %v2205 = vunpack.c.h.b16 %v2097
    %v2206 = vunpack.c.l.b16 %v2098
    %v2207 = vunpack.c.h.b16 %v2098
    %v2208 = vpack.c.b16 %v2146, %v2144
    %v2209 = vpack.c.b16 %v2147, %v2145
    %v2210 = vpack.c.b16 %v2150, %v2148
    %v2211 = vpack.c.b16 %v2151, %v2149
    %v2212 = vpack.c.b16 %v2154, %v2152
    %v2213 = vpack.c.b16 %v2155, %v2153
    %v2214 = vpack.c.b16 %v2158, %v2156
    %v2215 = vpack.c.b16 %v2159, %v2157
    %v2216 = vpack.c.b16 %v2162, %v2160
    %v2217 = vpack.c.b16 %v2163, %v2161
    %v2218 = vpack.c.b16 %v2166, %v2164
    %v2219 = vpack.c.b16 %v2167, %v2165
    %v2220 = vpack.c.b16 %v2170, %v2168
    %v2221 = vpack.c.b16 %v2171, %v2169
    %v2222 = vpack.c.b16 %v2174, %v2172
    %v2223 = vpack.c.b16 %v2175, %v2173
    %v2224 = vpack.c.b16 %v2178, %v2176
    %v2225 = vpack.c.b16 %v2179, %v2177
    %v2226 = vpack.c.b16 %v2182, %v2180
    %v2227 = vpack.c.b16 %v2183, %v2181
    %v2228 = vpack.c.b16 %v2186, %v2184
    %v2229 = vpack.c.b16 %v2187, %v2185
    %v2230 = vpack.c.b16 %v2190, %v2188
    %v2231 = vpack.c.b16 %v2191, %v2189
    %v2232 = vpack.c.b16 %v2194, %v2192
    %v2233 = vpack.c.b16 %v2195, %v2193
    %v2234 = vpack.c.b16 %v2198, %v2196
    %v2235 = vpack.c.b16 %v2199, %v2197
    %v2236 = vpack.c.b16 %v2202, %v2200
    %v2237 = vpack.c.b16 %v2203, %v2201
    %v2238 = vpack.c.b16 %v2206, %v2204
    %v2239 = vpack.c.b16 %v2207, %v2205
    %2272 = vmatprep.subr.bf16.mxu0 %v2223
    %2273 = vmatpush1.bf16.msra.mxu0 %v2222
    %2274 = vmatprep.subr.bf16.mxu0 %v2221
    %2275 = vmatpush1.bf16.msra.mxu0 %v2220
    %2276 = vmatprep.subr.bf16.mxu0 %v2219
    %2277 = vmatpush1.bf16.msra.mxu0 %v2218
    %2278 = vmatprep.subr.bf16.mxu0 %v2217
    %2279 = vmatpush1.bf16.msra.mxu0 %v2216
    %2280 = vmatprep.subr.bf16.mxu0 %v2215
    %2281 = vmatpush1.bf16.msra.mxu0 %v2214
    %2282 = vmatprep.subr.bf16.mxu0 %v2213
    %2283 = vmatpush1.bf16.msra.mxu0 %v2212
    %2284 = vmatprep.subr.bf16.mxu0 %v2211
    %2285 = vmatpush1.bf16.msra.mxu0 %v2210
    %2286 = vmatprep.subr.bf16.mxu0 %v2209
    %2287 = vmatpush1.bf16.msra.mxu0 %v2208
    %2288 = vmatprep.subr.bf16.mxu0 %v2239
    %2289 = vmatpush2.bf16.msra.mxu0 %v2238
    %2290 = vmatprep.subr.bf16.mxu0 %v2237
    %2291 = vmatpush2.bf16.msra.mxu0 %v2236
    %2292 = vmatprep.subr.bf16.mxu0 %v2235
    %2293 = vmatpush2.bf16.msra.mxu0 %v2234
    %2294 = vmatprep.subr.bf16.mxu0 %v2233
    %2295 = vmatpush2.bf16.msra.mxu0 %v2232
    %2296 = vmatprep.subr.bf16.mxu0 %v2231
    %2297 = vmatpush2.bf16.msra.mxu0 %v2230
    %2298 = vmatprep.subr.bf16.mxu0 %v2229
    %2299 = vmatpush2.bf16.msra.mxu0 %v2228
    %2300 = vmatprep.subr.bf16.mxu0 %v2227
    %2301 = vmatpush2.bf16.msra.mxu0 %v2226
    %2302 = vmatprep.subr.bf16.mxu0 %v2225
    %2303 = vmatpush2.bf16.msra.mxu0 %v2224
    %2304 = vmatprep.mubr.bf16.mxu0 %v2035
    %2305 = vmatmul.mubr.bf16.gmra.mxu0 %v2034
    %v2306 = vpop.f32.mrf.mxu0
    %v2307 = vadd.f32 %v2105, %v2306
    %v2308 = vpop.f32.mrf.mxu0
    %v2309 = vadd.f32 %v2109, %v2308
    %v2310 = vpop.f32.mrf.mxu0
    %v2311 = vadd.f32 %v2105, %v2310
    %v2312 = vpop.f32.mrf.mxu0
    %v2313 = vadd.f32 %v2109, %v2312
    %2314 = vmatprep.mubr.bf16.mxu0 %v2037
    %2315 = vmatmul.mubr.bf16.gmra.mxu0 %v2036
    %v2316 = vpop.f32.mrf.mxu0
    %v2317 = vadd.f32 %v2105, %v2316
    %v2318 = vpop.f32.mrf.mxu0
    %v2319 = vadd.f32 %v2109, %v2318
    %v2320 = vpop.f32.mrf.mxu0
    %v2321 = vadd.f32 %v2105, %v2320
    %v2322 = vpop.f32.mrf.mxu0
    %v2323 = vadd.f32 %v2109, %v2322
    %2324 = vmatprep.mubr.bf16.mxu0 %v2039
    %2325 = vmatmul.mubr.bf16.gmra.mxu0 %v2038
    %v2326 = vpop.f32.mrf.mxu0
    %v2327 = vadd.f32 %v2105, %v2326
    %v2328 = vpop.f32.mrf.mxu0
    %v2329 = vadd.f32 %v2109, %v2328
    %v2330 = vpop.f32.mrf.mxu0
    %v2331 = vadd.f32 %v2105, %v2330
    %v2332 = vpop.f32.mrf.mxu0
    %v2333 = vadd.f32 %v2109, %v2332
    %2334 = vmatprep.mubr.bf16.mxu0 %v2041
    %2335 = vmatmul.mubr.bf16.gmra.mxu0 %v2040
    %v2336 = vpop.f32.mrf.mxu0
    %v2337 = vadd.f32 %v2105, %v2336
    %v2338 = vpop.f32.mrf.mxu0
    %v2339 = vadd.f32 %v2109, %v2338
    %v2340 = vpop.f32.mrf.mxu0
    %v2341 = vadd.f32 %v2105, %v2340
    %v2342 = vpop.f32.mrf.mxu0
    %v2343 = vadd.f32 %v2109, %v2342
    %2344 = vmatprep.mubr.bf16.mxu0 %v2043
    %2345 = vmatmul.mubr.bf16.gmra.mxu0 %v2042
    %v2346 = vpop.f32.mrf.mxu0
    %v2347 = vadd.f32 %v2105, %v2346
    %v2348 = vpop.f32.mrf.mxu0
    %v2349 = vadd.f32 %v2109, %v2348
    %v2350 = vpop.f32.mrf.mxu0
    %v2351 = vadd.f32 %v2105, %v2350
    %v2352 = vpop.f32.mrf.mxu0
    %v2353 = vadd.f32 %v2109, %v2352
    %2354 = vmatprep.mubr.bf16.mxu0 %v2045
    %2355 = vmatmul.mubr.bf16.gmra.mxu0 %v2044
    %v2356 = vpop.f32.mrf.mxu0
    %v2357 = vadd.f32 %v2105, %v2356
    %v2358 = vpop.f32.mrf.mxu0
    %v2359 = vadd.f32 %v2109, %v2358
    %v2360 = vpop.f32.mrf.mxu0
    %v2361 = vadd.f32 %v2105, %v2360
    %v2362 = vpop.f32.mrf.mxu0
    %v2363 = vadd.f32 %v2109, %v2362
    %2364 = vmatprep.mubr.bf16.mxu0 %v2047
    %2365 = vmatmul.mubr.bf16.gmra.mxu0 %v2046
    %v2366 = vpop.f32.mrf.mxu0
    %v2367 = vadd.f32 %v2105, %v2366
    %v2368 = vpop.f32.mrf.mxu0
    %v2369 = vadd.f32 %v2109, %v2368
    %v2370 = vpop.f32.mrf.mxu0
    %v2371 = vadd.f32 %v2105, %v2370
    %v2372 = vpop.f32.mrf.mxu0
    %v2373 = vadd.f32 %v2109, %v2372
    %2374 = vmatprep.mubr.bf16.mxu0 %v2049
    %2375 = vmatmul.mubr.bf16.gmra.mxu0 %v2048
    %v2376 = vpop.f32.mrf.mxu0
    %v2377 = vadd.f32 %v2105, %v2376
    %v2378 = vpop.f32.mrf.mxu0
    %v2379 = vadd.f32 %v2109, %v2378
    %v2380 = vpop.f32.mrf.mxu0
    %v2381 = vadd.f32 %v2105, %v2380
    %v2382 = vpop.f32.mrf.mxu0
    %v2383 = vadd.f32 %v2109, %v2382
    %2384 = vmatprep.mubr.bf16.mxu0 %v2051
    %2385 = vmatmul.mubr.bf16.gmra.mxu0 %v2050
    %v2386 = vpop.f32.mrf.mxu0
    %v2387 = vadd.f32 %v2105, %v2386
    %v2388 = vpop.f32.mrf.mxu0
    %v2389 = vadd.f32 %v2109, %v2388
    %v2390 = vpop.f32.mrf.mxu0
    %v2391 = vadd.f32 %v2105, %v2390
    %v2392 = vpop.f32.mrf.mxu0
    %v2393 = vadd.f32 %v2109, %v2392
    %2394 = vmatprep.mubr.bf16.mxu0 %v2053
    %2395 = vmatmul.mubr.bf16.gmra.mxu0 %v2052
    %v2396 = vpop.f32.mrf.mxu0
    %v2397 = vadd.f32 %v2105, %v2396
    %v2398 = vpop.f32.mrf.mxu0
    %v2399 = vadd.f32 %v2109, %v2398
    %v2400 = vpop.f32.mrf.mxu0
    %v2401 = vadd.f32 %v2105, %v2400
    %v2402 = vpop.f32.mrf.mxu0
    %v2403 = vadd.f32 %v2109, %v2402
    %2404 = vmatprep.mubr.bf16.mxu0 %v2055
    %2405 = vmatmul.mubr.bf16.gmra.mxu0 %v2054
    %v2406 = vpop.f32.mrf.mxu0
    %v2407 = vadd.f32 %v2105, %v2406
    %v2408 = vpop.f32.mrf.mxu0
    %v2409 = vadd.f32 %v2109, %v2408
    %v2410 = vpop.f32.mrf.mxu0
    %v2411 = vadd.f32 %v2105, %v2410
    %v2412 = vpop.f32.mrf.mxu0
    %v2413 = vadd.f32 %v2109, %v2412
    %2414 = vmatprep.mubr.bf16.mxu0 %v2057
    %2415 = vmatmul.mubr.bf16.gmra.mxu0 %v2056
    %v2416 = vpop.f32.mrf.mxu0
    %v2417 = vadd.f32 %v2105, %v2416
    %v2418 = vpop.f32.mrf.mxu0
    %v2419 = vadd.f32 %v2109, %v2418
    %v2420 = vpop.f32.mrf.mxu0
    %v2421 = vadd.f32 %v2105, %v2420
    %v2422 = vpop.f32.mrf.mxu0
    %v2423 = vadd.f32 %v2109, %v2422
    %2424 = vmatprep.mubr.bf16.mxu0 %v2059
    %2425 = vmatmul.mubr.bf16.gmra.mxu0 %v2058
    %v2426 = vpop.f32.mrf.mxu0
    %v2427 = vadd.f32 %v2105, %v2426
    %v2428 = vpop.f32.mrf.mxu0
    %v2429 = vadd.f32 %v2109, %v2428
    %v2430 = vpop.f32.mrf.mxu0
    %v2431 = vadd.f32 %v2105, %v2430
    %v2432 = vpop.f32.mrf.mxu0
    %v2433 = vadd.f32 %v2109, %v2432
    %2434 = vmatprep.mubr.bf16.mxu0 %v2061
    %2435 = vmatmul.mubr.bf16.gmra.mxu0 %v2060
    %v2436 = vpop.f32.mrf.mxu0
    %v2437 = vadd.f32 %v2105, %v2436
    %v2438 = vpop.f32.mrf.mxu0
    %v2439 = vadd.f32 %v2109, %v2438
    %v2440 = vpop.f32.mrf.mxu0
    %v2441 = vadd.f32 %v2105, %v2440
    %v2442 = vpop.f32.mrf.mxu0
    %v2443 = vadd.f32 %v2109, %v2442
    %2444 = vmatprep.mubr.bf16.mxu0 %v2063
    %2445 = vmatmul.mubr.bf16.gmra.mxu0 %v2062
    %v2446 = vpop.f32.mrf.mxu0
    %v2447 = vadd.f32 %v2105, %v2446
    %v2448 = vpop.f32.mrf.mxu0
    %v2449 = vadd.f32 %v2109, %v2448
    %v2450 = vpop.f32.mrf.mxu0
    %v2451 = vadd.f32 %v2105, %v2450
    %v2452 = vpop.f32.mrf.mxu0
    %v2453 = vadd.f32 %v2109, %v2452
    %2454 = vmatprep.mubr.bf16.mxu0 %v2065
    %2455 = vmatmul.mubr.bf16.gmra.mxu0 %v2064
    %v2456 = vpop.f32.mrf.mxu0
    %v2457 = vadd.f32 %v2105, %v2456
    %v2458 = vpop.f32.mrf.mxu0
    %v2459 = vadd.f32 %v2109, %v2458
    %v2460 = vpop.f32.mrf.mxu0
    %v2461 = vadd.f32 %v2105, %v2460
    %v2462 = vpop.f32.mrf.mxu0
    %v2463 = vadd.f32 %v2109, %v2462
    %2464 = vdwg.mxu0
    %v2465 = vmax.f32 %v2307, 0.0
    %v2466 = vmax.f32 %v2309, 0.0
    %v2467 = vmax.f32 %v2311, 0.0
    %v2468 = vmax.f32 %v2313, 0.0
    %v2469 = vmax.f32 %v2317, 0.0
    %v2470 = vmax.f32 %v2319, 0.0
    %v2471 = vmax.f32 %v2321, 0.0
    %v2472 = vmax.f32 %v2323, 0.0
    %v2473 = vmax.f32 %v2327, 0.0
    %v2474 = vmax.f32 %v2329, 0.0
    %v2475 = vmax.f32 %v2331, 0.0
    %v2476 = vmax.f32 %v2333, 0.0
    %v2477 = vmax.f32 %v2337, 0.0
    %v2478 = vmax.f32 %v2339, 0.0
    %v2479 = vmax.f32 %v2341, 0.0
    %v2480 = vmax.f32 %v2343, 0.0
    %v2481 = vmax.f32 %v2347, 0.0
    %v2482 = vmax.f32 %v2349, 0.0
    %v2483 = vmax.f32 %v2351, 0.0
    %v2484 = vmax.f32 %v2353, 0.0
    %v2485 = vmax.f32 %v2357, 0.0
    %v2486 = vmax.f32 %v2359, 0.0
    %v2487 = vmax.f32 %v2361, 0.0
    %v2488 = vmax.f32 %v2363, 0.0
    %v2489 = vmax.f32 %v2367, 0.0
    %v2490 = vmax.f32 %v2369, 0.0
    %v2491 = vmax.f32 %v2371, 0.0
    %v2492 = vmax.f32 %v2373, 0.0
    %v2493 = vmax.f32 %v2377, 0.0
    %v2494 = vmax.f32 %v2379, 0.0
    %v2495 = vmax.f32 %v2381, 0.0
    %v2496 = vmax.f32 %v2383, 0.0
    %v2497 = vmax.f32 %v2387, 0.0
    %v2498 = vmax.f32 %v2389, 0.0
    %v2499 = vmax.f32 %v2391, 0.0
    %v2500 = vmax.f32 %v2393, 0.0
    %v2501 = vmax.f32 %v2397, 0.0
    %v2502 = vmax.f32 %v2399, 0.0
    %v2503 = vmax.f32 %v2401, 0.0
    %v2504 = vmax.f32 %v2403, 0.0
    %v2505 = vmax.f32 %v2407, 0.0
    %v2506 = vmax.f32 %v2409, 0.0
    %v2507 = vmax.f32 %v2411, 0.0
    %v2508 = vmax.f32 %v2413, 0.0
    %v2509 = vmax.f32 %v2417, 0.0
    %v2510 = vmax.f32 %v2419, 0.0
    %v2511 = vmax.f32 %v2421, 0.0
    %v2512 = vmax.f32 %v2423, 0.0
    %v2513 = vmax.f32 %v2427, 0.0
    %v2514 = vmax.f32 %v2429, 0.0
    %v2515 = vmax.f32 %v2431, 0.0
    %v2516 = vmax.f32 %v2433, 0.0
    %v2517 = vmax.f32 %v2437, 0.0
    %v2518 = vmax.f32 %v2439, 0.0
    %v2519 = vmax.f32 %v2441, 0.0
    %v2520 = vmax.f32 %v2443, 0.0
    %v2521 = vmax.f32 %v2447, 0.0
    %v2522 = vmax.f32 %v2449, 0.0
    %v2523 = vmax.f32 %v2451, 0.0
    %v2524 = vmax.f32 %v2453, 0.0
    %v2525 = vmax.f32 %v2457, 0.0
    %v2526 = vmax.f32 %v2459, 0.0
    %v2527 = vmax.f32 %v2461, 0.0
    %v2528 = vmax.f32 %v2463, 0.0
    %v2529 = vpack.c.bf16 %v2467, %v2465
    %v2530 = vpack.c.bf16 %v2468, %v2466
    %v2531 = vpack.c.bf16 %v2471, %v2469
    %v2532 = vpack.c.bf16 %v2472, %v2470
    %v2533 = vpack.c.bf16 %v2475, %v2473
    %v2534 = vpack.c.bf16 %v2476, %v2474
    %v2535 = vpack.c.bf16 %v2479, %v2477
    %v2536 = vpack.c.bf16 %v2480, %v2478
    %v2537 = vpack.c.bf16 %v2483, %v2481
    %v2538 = vpack.c.bf16 %v2484, %v2482
    %v2539 = vpack.c.bf16 %v2487, %v2485
    %v2540 = vpack.c.bf16 %v2488, %v2486
    %v2541 = vpack.c.bf16 %v2491, %v2489
    %v2542 = vpack.c.bf16 %v2492, %v2490
    %v2543 = vpack.c.bf16 %v2495, %v2493
    %v2544 = vpack.c.bf16 %v2496, %v2494
    %v2545 = vpack.c.bf16 %v2499, %v2497
    %v2546 = vpack.c.bf16 %v2500, %v2498
    %v2547 = vpack.c.bf16 %v2503, %v2501
    %v2548 = vpack.c.bf16 %v2504, %v2502
    %v2549 = vpack.c.bf16 %v2507, %v2505
    %v2550 = vpack.c.bf16 %v2508, %v2506
    %v2551 = vpack.c.bf16 %v2511, %v2509
    %v2552 = vpack.c.bf16 %v2512, %v2510
    %v2553 = vpack.c.bf16 %v2515, %v2513
    %v2554 = vpack.c.bf16 %v2516, %v2514
    %v2555 = vpack.c.bf16 %v2519, %v2517
    %v2556 = vpack.c.bf16 %v2520, %v2518
    %v2557 = vpack.c.bf16 %v2523, %v2521
    %v2558 = vpack.c.bf16 %v2524, %v2522
    %v2559 = vpack.c.bf16 %v2527, %v2525
    %v2560 = vpack.c.bf16 %v2528, %v2526
    %s2561 = scalar_lea.vmem [#allocation5], 1280
    %v2562 = vld [vmem:[%s2561] sm:$0xff]
    %v2563 = vld [vmem:[%s2561 + $0x8] sm:$0xff]
    %v2564 = vld [vmem:[%s2561 + $0x10] sm:$0xff]
    %v2565 = vld [vmem:[%s2561 + $0x18] sm:$0xff]
    %v2566 = vld [vmem:[%s2561 + $0x20] sm:$0xff]
    %v2567 = vld [vmem:[%s2561 + $0x28] sm:$0xff]
    %v2568 = vld [vmem:[%s2561 + $0x30] sm:$0xff]
    %v2569 = vld [vmem:[%s2561 + $0x38] sm:$0xff]
    %v2570 = vld [vmem:[%s2561 + $0x40] sm:$0xff]
    %v2571 = vld [vmem:[%s2561 + $0x48] sm:$0xff]
    %v2572 = vld [vmem:[%s2561 + $0x50] sm:$0xff]
    %v2573 = vld [vmem:[%s2561 + $0x58] sm:$0xff]
    %v2574 = vld [vmem:[%s2561 + $0x60] sm:$0xff]
    %v2575 = vld [vmem:[%s2561 + $0x68] sm:$0xff]
    %v2576 = vld [vmem:[%s2561 + $0x70] sm:$0xff]
    %v2577 = vld [vmem:[%s2561 + $0x78] sm:$0xff]
    %v2578 = vld [vmem:[%s2561 + $0x80] sm:$0xff]
    %v2579 = vld [vmem:[%s2561 + $0x88] sm:$0xff]
    %v2580 = vld [vmem:[%s2561 + $0x90] sm:$0xff]
    %v2581 = vld [vmem:[%s2561 + $0x98] sm:$0xff]
    %v2582 = vld [vmem:[%s2561 + $0xa0] sm:$0xff]
    %v2583 = vld [vmem:[%s2561 + $0xa8] sm:$0xff]
    %v2584 = vld [vmem:[%s2561 + $0xb0] sm:$0xff]
    %v2585 = vld [vmem:[%s2561 + $0xb8] sm:$0xff]
    %v2586 = vld [vmem:[%s2561 + $0xc0] sm:$0xff]
    %v2587 = vld [vmem:[%s2561 + $0xc8] sm:$0xff]
    %v2588 = vld [vmem:[%s2561 + $0xd0] sm:$0xff]
    %v2589 = vld [vmem:[%s2561 + $0xd8] sm:$0xff]
    %v2590 = vld [vmem:[%s2561 + $0xe0] sm:$0xff]
    %v2591 = vld [vmem:[%s2561 + $0xe8] sm:$0xff]
    %v2592 = vld [vmem:[%s2561 + $0xf0] sm:$0xff]
    %v2593 = vld [vmem:[%s2561 + $0xf8] sm:$0xff]
    %s2594 = scalar_lea.vmem [#allocation7], 10
    %v2595 = vld [vmem:[%s2594] sm:$0x3]
    %v2597 = vlaneseq
    %v2598 = vshrl.u32 %v2597, 7
    %v2599 = vsub.s32 0, %v2598
    %v2600 = vrot.slane %v2595, %v2599
    %v2601 = vlaneseq
    %v2602 = vshrl.u32 %v2601, 7
    %v2603 = vsub.s32 1, %v2602
    %v2604 = vrot.slane %v2595, %v2603
    %v2639 = vunpack.c.l.b16 %v2562
    %v2640 = vunpack.c.h.b16 %v2562
    %v2641 = vunpack.c.l.b16 %v2563
    %v2642 = vunpack.c.h.b16 %v2563
    %v2643 = vunpack.c.l.b16 %v2564
    %v2644 = vunpack.c.h.b16 %v2564
    %v2645 = vunpack.c.l.b16 %v2565
    %v2646 = vunpack.c.h.b16 %v2565
    %v2647 = vunpack.c.l.b16 %v2566
    %v2648 = vunpack.c.h.b16 %v2566
    %v2649 = vunpack.c.l.b16 %v2567
    %v2650 = vunpack.c.h.b16 %v2567
    %v2651 = vunpack.c.l.b16 %v2568
    %v2652 = vunpack.c.h.b16 %v2568
    %v2653 = vunpack.c.l.b16 %v2569
    %v2654 = vunpack.c.h.b16 %v2569
    %v2655 = vunpack.c.l.b16 %v2570
    %v2656 = vunpack.c.h.b16 %v2570
    %v2657 = vunpack.c.l.b16 %v2571
    %v2658 = vunpack.c.h.b16 %v2571
    %v2659 = vunpack.c.l.b16 %v2572
    %v2660 = vunpack.c.h.b16 %v2572
    %v2661 = vunpack.c.l.b16 %v2573
    %v2662 = vunpack.c.h.b16 %v2573
    %v2663 = vunpack.c.l.b16 %v2574
    %v2664 = vunpack.c.h.b16 %v2574
    %v2665 = vunpack.c.l.b16 %v2575
    %v2666 = vunpack.c.h.b16 %v2575
    %v2667 = vunpack.c.l.b16 %v2576
    %v2668 = vunpack.c.h.b16 %v2576
    %v2669 = vunpack.c.l.b16 %v2577
    %v2670 = vunpack.c.h.b16 %v2577
    %v2671 = vunpack.c.l.b16 %v2578
    %v2672 = vunpack.c.h.b16 %v2578
    %v2673 = vunpack.c.l.b16 %v2579
    %v2674 = vunpack.c.h.b16 %v2579
    %v2675 = vunpack.c.l.b16 %v2580
    %v2676 = vunpack.c.h.b16 %v2580
    %v2677 = vunpack.c.l.b16 %v2581
    %v2678 = vunpack.c.h.b16 %v2581
    %v2679 = vunpack.c.l.b16 %v2582
    %v2680 = vunpack.c.h.b16 %v2582
    %v2681 = vunpack.c.l.b16 %v2583
    %v2682 = vunpack.c.h.b16 %v2583
    %v2683 = vunpack.c.l.b16 %v2584
    %v2684 = vunpack.c.h.b16 %v2584
    %v2685 = vunpack.c.l.b16 %v2585
    %v2686 = vunpack.c.h.b16 %v2585
    %v2687 = vunpack.c.l.b16 %v2586
    %v2688 = vunpack.c.h.b16 %v2586
    %v2689 = vunpack.c.l.b16 %v2587
    %v2690 = vunpack.c.h.b16 %v2587
    %v2691 = vunpack.c.l.b16 %v2588
    %v2692 = vunpack.c.h.b16 %v2588
    %v2693 = vunpack.c.l.b16 %v2589
    %v2694 = vunpack.c.h.b16 %v2589
    %v2695 = vunpack.c.l.b16 %v2590
    %v2696 = vunpack.c.h.b16 %v2590
    %v2697 = vunpack.c.l.b16 %v2591
    %v2698 = vunpack.c.h.b16 %v2591
    %v2699 = vunpack.c.l.b16 %v2592
    %v2700 = vunpack.c.h.b16 %v2592
    %v2701 = vunpack.c.l.b16 %v2593
    %v2702 = vunpack.c.h.b16 %v2593
    %v2703 = vpack.c.b16 %v2641, %v2639
    %v2704 = vpack.c.b16 %v2642, %v2640
    %v2705 = vpack.c.b16 %v2645, %v2643
    %v2706 = vpack.c.b16 %v2646, %v2644
    %v2707 = vpack.c.b16 %v2649, %v2647
    %v2708 = vpack.c.b16 %v2650, %v2648
    %v2709 = vpack.c.b16 %v2653, %v2651
    %v2710 = vpack.c.b16 %v2654, %v2652
    %v2711 = vpack.c.b16 %v2657, %v2655
    %v2712 = vpack.c.b16 %v2658, %v2656
    %v2713 = vpack.c.b16 %v2661, %v2659
    %v2714 = vpack.c.b16 %v2662, %v2660
    %v2715 = vpack.c.b16 %v2665, %v2663
    %v2716 = vpack.c.b16 %v2666, %v2664
    %v2717 = vpack.c.b16 %v2669, %v2667
    %v2718 = vpack.c.b16 %v2670, %v2668
    %v2719 = vpack.c.b16 %v2673, %v2671
    %v2720 = vpack.c.b16 %v2674, %v2672
    %v2721 = vpack.c.b16 %v2677, %v2675
    %v2722 = vpack.c.b16 %v2678, %v2676
    %v2723 = vpack.c.b16 %v2681, %v2679
    %v2724 = vpack.c.b16 %v2682, %v2680
    %v2725 = vpack.c.b16 %v2685, %v2683
    %v2726 = vpack.c.b16 %v2686, %v2684
    %v2727 = vpack.c.b16 %v2689, %v2687
    %v2728 = vpack.c.b16 %v2690, %v2688
    %v2729 = vpack.c.b16 %v2693, %v2691
    %v2730 = vpack.c.b16 %v2694, %v2692
    %v2731 = vpack.c.b16 %v2697, %v2695
    %v2732 = vpack.c.b16 %v2698, %v2696
    %v2733 = vpack.c.b16 %v2701, %v2699
    %v2734 = vpack.c.b16 %v2702, %v2700
    %2767 = vmatprep.subr.bf16.mxu0 %v2718
    %2768 = vmatpush1.bf16.msra.mxu0 %v2717
    %2769 = vmatprep.subr.bf16.mxu0 %v2716
    %2770 = vmatpush1.bf16.msra.mxu0 %v2715
    %2771 = vmatprep.subr.bf16.mxu0 %v2714
    %2772 = vmatpush1.bf16.msra.mxu0 %v2713
    %2773 = vmatprep.subr.bf16.mxu0 %v2712
    %2774 = vmatpush1.bf16.msra.mxu0 %v2711
    %2775 = vmatprep.subr.bf16.mxu0 %v2710
    %2776 = vmatpush1.bf16.msra.mxu0 %v2709
    %2777 = vmatprep.subr.bf16.mxu0 %v2708
    %2778 = vmatpush1.bf16.msra.mxu0 %v2707
    %2779 = vmatprep.subr.bf16.mxu0 %v2706
    %2780 = vmatpush1.bf16.msra.mxu0 %v2705
    %2781 = vmatprep.subr.bf16.mxu0 %v2704
    %2782 = vmatpush1.bf16.msra.mxu0 %v2703
    %2783 = vmatprep.subr.bf16.mxu0 %v2734
    %2784 = vmatpush2.bf16.msra.mxu0 %v2733
    %2785 = vmatprep.subr.bf16.mxu0 %v2732
    %2786 = vmatpush2.bf16.msra.mxu0 %v2731
    %2787 = vmatprep.subr.bf16.mxu0 %v2730
    %2788 = vmatpush2.bf16.msra.mxu0 %v2729
    %2789 = vmatprep.subr.bf16.mxu0 %v2728
    %2790 = vmatpush2.bf16.msra.mxu0 %v2727
    %2791 = vmatprep.subr.bf16.mxu0 %v2726
    %2792 = vmatpush2.bf16.msra.mxu0 %v2725
    %2793 = vmatprep.subr.bf16.mxu0 %v2724
    %2794 = vmatpush2.bf16.msra.mxu0 %v2723
    %2795 = vmatprep.subr.bf16.mxu0 %v2722
    %2796 = vmatpush2.bf16.msra.mxu0 %v2721
    %2797 = vmatprep.subr.bf16.mxu0 %v2720
    %2798 = vmatpush2.bf16.msra.mxu0 %v2719
    %2799 = vmatprep.mubr.bf16.mxu0 %v2530
    %2800 = vmatmul.mubr.bf16.gmra.mxu0 %v2529
    %v2801 = vpop.f32.mrf.mxu0
    %v2802 = vadd.f32 %v2600, %v2801
    %v2803 = vpop.f32.mrf.mxu0
    %v2804 = vadd.f32 %v2604, %v2803
    %v2805 = vpop.f32.mrf.mxu0
    %v2806 = vadd.f32 %v2600, %v2805
    %v2807 = vpop.f32.mrf.mxu0
    %v2808 = vadd.f32 %v2604, %v2807
    %2809 = vmatprep.mubr.bf16.mxu0 %v2532
    %2810 = vmatmul.mubr.bf16.gmra.mxu0 %v2531
    %v2811 = vpop.f32.mrf.mxu0
    %v2812 = vadd.f32 %v2600, %v2811
    %v2813 = vpop.f32.mrf.mxu0
    %v2814 = vadd.f32 %v2604, %v2813
    %v2815 = vpop.f32.mrf.mxu0
    %v2816 = vadd.f32 %v2600, %v2815
    %v2817 = vpop.f32.mrf.mxu0
    %v2818 = vadd.f32 %v2604, %v2817
    %2819 = vmatprep.mubr.bf16.mxu0 %v2534
    %2820 = vmatmul.mubr.bf16.gmra.mxu0 %v2533
    %v2821 = vpop.f32.mrf.mxu0
    %v2822 = vadd.f32 %v2600, %v2821
    %v2823 = vpop.f32.mrf.mxu0
    %v2824 = vadd.f32 %v2604, %v2823
    %v2825 = vpop.f32.mrf.mxu0
    %v2826 = vadd.f32 %v2600, %v2825
    %v2827 = vpop.f32.mrf.mxu0
    %v2828 = vadd.f32 %v2604, %v2827
    %2829 = vmatprep.mubr.bf16.mxu0 %v2536
    %2830 = vmatmul.mubr.bf16.gmra.mxu0 %v2535
    %v2831 = vpop.f32.mrf.mxu0
    %v2832 = vadd.f32 %v2600, %v2831
    %v2833 = vpop.f32.mrf.mxu0
    %v2834 = vadd.f32 %v2604, %v2833
    %v2835 = vpop.f32.mrf.mxu0
    %v2836 = vadd.f32 %v2600, %v2835
    %v2837 = vpop.f32.mrf.mxu0
    %v2838 = vadd.f32 %v2604, %v2837
    %2839 = vmatprep.mubr.bf16.mxu0 %v2538
    %2840 = vmatmul.mubr.bf16.gmra.mxu0 %v2537
    %v2841 = vpop.f32.mrf.mxu0
    %v2842 = vadd.f32 %v2600, %v2841
    %v2843 = vpop.f32.mrf.mxu0
    %v2844 = vadd.f32 %v2604, %v2843
    %v2845 = vpop.f32.mrf.mxu0
    %v2846 = vadd.f32 %v2600, %v2845
    %v2847 = vpop.f32.mrf.mxu0
    %v2848 = vadd.f32 %v2604, %v2847
    %2849 = vmatprep.mubr.bf16.mxu0 %v2540
    %2850 = vmatmul.mubr.bf16.gmra.mxu0 %v2539
    %v2851 = vpop.f32.mrf.mxu0
    %v2852 = vadd.f32 %v2600, %v2851
    %v2853 = vpop.f32.mrf.mxu0
    %v2854 = vadd.f32 %v2604, %v2853
    %v2855 = vpop.f32.mrf.mxu0
    %v2856 = vadd.f32 %v2600, %v2855
    %v2857 = vpop.f32.mrf.mxu0
    %v2858 = vadd.f32 %v2604, %v2857
    %2859 = vmatprep.mubr.bf16.mxu0 %v2542
    %2860 = vmatmul.mubr.bf16.gmra.mxu0 %v2541
    %v2861 = vpop.f32.mrf.mxu0
    %v2862 = vadd.f32 %v2600, %v2861
    %v2863 = vpop.f32.mrf.mxu0
    %v2864 = vadd.f32 %v2604, %v2863
    %v2865 = vpop.f32.mrf.mxu0
    %v2866 = vadd.f32 %v2600, %v2865
    %v2867 = vpop.f32.mrf.mxu0
    %v2868 = vadd.f32 %v2604, %v2867
    %2869 = vmatprep.mubr.bf16.mxu0 %v2544
    %2870 = vmatmul.mubr.bf16.gmra.mxu0 %v2543
    %v2871 = vpop.f32.mrf.mxu0
    %v2872 = vadd.f32 %v2600, %v2871
    %v2873 = vpop.f32.mrf.mxu0
    %v2874 = vadd.f32 %v2604, %v2873
    %v2875 = vpop.f32.mrf.mxu0
    %v2876 = vadd.f32 %v2600, %v2875
    %v2877 = vpop.f32.mrf.mxu0
    %v2878 = vadd.f32 %v2604, %v2877
    %2879 = vmatprep.mubr.bf16.mxu0 %v2546
    %2880 = vmatmul.mubr.bf16.gmra.mxu0 %v2545
    %v2881 = vpop.f32.mrf.mxu0
    %v2882 = vadd.f32 %v2600, %v2881
    %v2883 = vpop.f32.mrf.mxu0
    %v2884 = vadd.f32 %v2604, %v2883
    %v2885 = vpop.f32.mrf.mxu0
    %v2886 = vadd.f32 %v2600, %v2885
    %v2887 = vpop.f32.mrf.mxu0
    %v2888 = vadd.f32 %v2604, %v2887
    %2889 = vmatprep.mubr.bf16.mxu0 %v2548
    %2890 = vmatmul.mubr.bf16.gmra.mxu0 %v2547
    %v2891 = vpop.f32.mrf.mxu0
    %v2892 = vadd.f32 %v2600, %v2891
    %v2893 = vpop.f32.mrf.mxu0
    %v2894 = vadd.f32 %v2604, %v2893
    %v2895 = vpop.f32.mrf.mxu0
    %v2896 = vadd.f32 %v2600, %v2895
    %v2897 = vpop.f32.mrf.mxu0
    %v2898 = vadd.f32 %v2604, %v2897
    %2899 = vmatprep.mubr.bf16.mxu0 %v2550
    %2900 = vmatmul.mubr.bf16.gmra.mxu0 %v2549
    %v2901 = vpop.f32.mrf.mxu0
    %v2902 = vadd.f32 %v2600, %v2901
    %v2903 = vpop.f32.mrf.mxu0
    %v2904 = vadd.f32 %v2604, %v2903
    %v2905 = vpop.f32.mrf.mxu0
    %v2906 = vadd.f32 %v2600, %v2905
    %v2907 = vpop.f32.mrf.mxu0
    %v2908 = vadd.f32 %v2604, %v2907
    %2909 = vmatprep.mubr.bf16.mxu0 %v2552
    %2910 = vmatmul.mubr.bf16.gmra.mxu0 %v2551
    %v2911 = vpop.f32.mrf.mxu0
    %v2912 = vadd.f32 %v2600, %v2911
    %v2913 = vpop.f32.mrf.mxu0
    %v2914 = vadd.f32 %v2604, %v2913
    %v2915 = vpop.f32.mrf.mxu0
    %v2916 = vadd.f32 %v2600, %v2915
    %v2917 = vpop.f32.mrf.mxu0
    %v2918 = vadd.f32 %v2604, %v2917
    %2919 = vmatprep.mubr.bf16.mxu0 %v2554
    %2920 = vmatmul.mubr.bf16.gmra.mxu0 %v2553
    %v2921 = vpop.f32.mrf.mxu0
    %v2922 = vadd.f32 %v2600, %v2921
    %v2923 = vpop.f32.mrf.mxu0
    %v2924 = vadd.f32 %v2604, %v2923
    %v2925 = vpop.f32.mrf.mxu0
    %v2926 = vadd.f32 %v2600, %v2925
    %v2927 = vpop.f32.mrf.mxu0
    %v2928 = vadd.f32 %v2604, %v2927
    %2929 = vmatprep.mubr.bf16.mxu0 %v2556
    %2930 = vmatmul.mubr.bf16.gmra.mxu0 %v2555
    %v2931 = vpop.f32.mrf.mxu0
    %v2932 = vadd.f32 %v2600, %v2931
    %v2933 = vpop.f32.mrf.mxu0
    %v2934 = vadd.f32 %v2604, %v2933
    %v2935 = vpop.f32.mrf.mxu0
    %v2936 = vadd.f32 %v2600, %v2935
    %v2937 = vpop.f32.mrf.mxu0
    %v2938 = vadd.f32 %v2604, %v2937
    %2939 = vmatprep.mubr.bf16.mxu0 %v2558
    %2940 = vmatmul.mubr.bf16.gmra.mxu0 %v2557
    %v2941 = vpop.f32.mrf.mxu0
    %v2942 = vadd.f32 %v2600, %v2941
    %v2943 = vpop.f32.mrf.mxu0
    %v2944 = vadd.f32 %v2604, %v2943
    %v2945 = vpop.f32.mrf.mxu0
    %v2946 = vadd.f32 %v2600, %v2945
    %v2947 = vpop.f32.mrf.mxu0
    %v2948 = vadd.f32 %v2604, %v2947
    %2949 = vmatprep.mubr.bf16.mxu0 %v2560
    %2950 = vmatmul.mubr.bf16.gmra.mxu0 %v2559
    %v2951 = vpop.f32.mrf.mxu0
    %v2952 = vadd.f32 %v2600, %v2951
    %v2953 = vpop.f32.mrf.mxu0
    %v2954 = vadd.f32 %v2604, %v2953
    %v2955 = vpop.f32.mrf.mxu0
    %v2956 = vadd.f32 %v2600, %v2955
    %v2957 = vpop.f32.mrf.mxu0
    %v2958 = vadd.f32 %v2604, %v2957
    %2959 = vdwg.mxu0
    %v2960 = vmax.f32 %v2802, 0.0
    %v2961 = vmax.f32 %v2804, 0.0
    %v2962 = vmax.f32 %v2806, 0.0
    %v2963 = vmax.f32 %v2808, 0.0
    %v2964 = vmax.f32 %v2812, 0.0
    %v2965 = vmax.f32 %v2814, 0.0
    %v2966 = vmax.f32 %v2816, 0.0
    %v2967 = vmax.f32 %v2818, 0.0
    %v2968 = vmax.f32 %v2822, 0.0
    %v2969 = vmax.f32 %v2824, 0.0
    %v2970 = vmax.f32 %v2826, 0.0
    %v2971 = vmax.f32 %v2828, 0.0
    %v2972 = vmax.f32 %v2832, 0.0
    %v2973 = vmax.f32 %v2834, 0.0
    %v2974 = vmax.f32 %v2836, 0.0
    %v2975 = vmax.f32 %v2838, 0.0
    %v2976 = vmax.f32 %v2842, 0.0
    %v2977 = vmax.f32 %v2844, 0.0
    %v2978 = vmax.f32 %v2846, 0.0
    %v2979 = vmax.f32 %v2848, 0.0
    %v2980 = vmax.f32 %v2852, 0.0
    %v2981 = vmax.f32 %v2854, 0.0
    %v2982 = vmax.f32 %v2856, 0.0
    %v2983 = vmax.f32 %v2858, 0.0
    %v2984 = vmax.f32 %v2862, 0.0
    %v2985 = vmax.f32 %v2864, 0.0
    %v2986 = vmax.f32 %v2866, 0.0
    %v2987 = vmax.f32 %v2868, 0.0
    %v2988 = vmax.f32 %v2872, 0.0
    %v2989 = vmax.f32 %v2874, 0.0
    %v2990 = vmax.f32 %v2876, 0.0
    %v2991 = vmax.f32 %v2878, 0.0
    %v2992 = vmax.f32 %v2882, 0.0
    %v2993 = vmax.f32 %v2884, 0.0
    %v2994 = vmax.f32 %v2886, 0.0
    %v2995 = vmax.f32 %v2888, 0.0
    %v2996 = vmax.f32 %v2892, 0.0
    %v2997 = vmax.f32 %v2894, 0.0
    %v2998 = vmax.f32 %v2896, 0.0
    %v2999 = vmax.f32 %v2898, 0.0
    %v3000 = vmax.f32 %v2902, 0.0
    %v3001 = vmax.f32 %v2904, 0.0
    %v3002 = vmax.f32 %v2906, 0.0
    %v3003 = vmax.f32 %v2908, 0.0
    %v3004 = vmax.f32 %v2912, 0.0
    %v3005 = vmax.f32 %v2914, 0.0
    %v3006 = vmax.f32 %v2916, 0.0
    %v3007 = vmax.f32 %v2918, 0.0
    %v3008 = vmax.f32 %v2922, 0.0
    %v3009 = vmax.f32 %v2924, 0.0
    %v3010 = vmax.f32 %v2926, 0.0
    %v3011 = vmax.f32 %v2928, 0.0
    %v3012 = vmax.f32 %v2932, 0.0
    %v3013 = vmax.f32 %v2934, 0.0
    %v3014 = vmax.f32 %v2936, 0.0
    %v3015 = vmax.f32 %v2938, 0.0
    %v3016 = vmax.f32 %v2942, 0.0
    %v3017 = vmax.f32 %v2944, 0.0
    %v3018 = vmax.f32 %v2946, 0.0
    %v3019 = vmax.f32 %v2948, 0.0
    %v3020 = vmax.f32 %v2952, 0.0
    %v3021 = vmax.f32 %v2954, 0.0
    %v3022 = vmax.f32 %v2956, 0.0
    %v3023 = vmax.f32 %v2958, 0.0
    %3024 = vst [vmem:[#allocation8] sm:$0xff] %v2960
    %3025 = vst [vmem:[#allocation8 + $0x8] sm:$0xff] %v2961
    %3026 = vst [vmem:[#allocation8 + $0x10] sm:$0xff] %v2962
    %3027 = vst [vmem:[#allocation8 + $0x18] sm:$0xff] %v2963
    %3028 = vst [vmem:[#allocation8 + $0x20] sm:$0xff] %v2964
    %3029 = vst [vmem:[#allocation8 + $0x28] sm:$0xff] %v2965
    %3030 = vst [vmem:[#allocation8 + $0x30] sm:$0xff] %v2966
    %3031 = vst [vmem:[#allocation8 + $0x38] sm:$0xff] %v2967
    %3032 = vst [vmem:[#allocation8 + $0x40] sm:$0xff] %v2968
    %3033 = vst [vmem:[#allocation8 + $0x48] sm:$0xff] %v2969
    %3034 = vst [vmem:[#allocation8 + $0x50] sm:$0xff] %v2970
    %3035 = vst [vmem:[#allocation8 + $0x58] sm:$0xff] %v2971
    %3036 = vst [vmem:[#allocation8 + $0x60] sm:$0xff] %v2972
    %3037 = vst [vmem:[#allocation8 + $0x68] sm:$0xff] %v2973
    %3038 = vst [vmem:[#allocation8 + $0x70] sm:$0xff] %v2974
    %3039 = vst [vmem:[#allocation8 + $0x78] sm:$0xff] %v2975
    %3040 = vst [vmem:[#allocation8 + $0x80] sm:$0xff] %v2976
    %3041 = vst [vmem:[#allocation8 + $0x88] sm:$0xff] %v2977
    %3042 = vst [vmem:[#allocation8 + $0x90] sm:$0xff] %v2978
    %3043 = vst [vmem:[#allocation8 + $0x98] sm:$0xff] %v2979
    %3044 = vst [vmem:[#allocation8 + $0xa0] sm:$0xff] %v2980
    %3045 = vst [vmem:[#allocation8 + $0xa8] sm:$0xff] %v2981
    %3046 = vst [vmem:[#allocation8 + $0xb0] sm:$0xff] %v2982
    %3047 = vst [vmem:[#allocation8 + $0xb8] sm:$0xff] %v2983
    %3048 = vst [vmem:[#allocation8 + $0xc0] sm:$0xff] %v2984
    %3049 = vst [vmem:[#allocation8 + $0xc8] sm:$0xff] %v2985
    %3050 = vst [vmem:[#allocation8 + $0xd0] sm:$0xff] %v2986
    %3051 = vst [vmem:[#allocation8 + $0xd8] sm:$0xff] %v2987
    %3052 = vst [vmem:[#allocation8 + $0xe0] sm:$0xff] %v2988
    %3053 = vst [vmem:[#allocation8 + $0xe8] sm:$0xff] %v2989
    %3054 = vst [vmem:[#allocation8 + $0xf0] sm:$0xff] %v2990
    %3055 = vst [vmem:[#allocation8 + $0xf8] sm:$0xff] %v2991
    %3056 = vst [vmem:[#allocation8 + $0x100] sm:$0xff] %v2992
    %3057 = vst [vmem:[#allocation8 + $0x108] sm:$0xff] %v2993
    %3058 = vst [vmem:[#allocation8 + $0x110] sm:$0xff] %v2994
    %3059 = vst [vmem:[#allocation8 + $0x118] sm:$0xff] %v2995
    %3060 = vst [vmem:[#allocation8 + $0x120] sm:$0xff] %v2996
    %3061 = vst [vmem:[#allocation8 + $0x128] sm:$0xff] %v2997
    %3062 = vst [vmem:[#allocation8 + $0x130] sm:$0xff] %v2998
    %3063 = vst [vmem:[#allocation8 + $0x138] sm:$0xff] %v2999
    %3064 = vst [vmem:[#allocation8 + $0x140] sm:$0xff] %v3000
    %3065 = vst [vmem:[#allocation8 + $0x148] sm:$0xff] %v3001
    %3066 = vst [vmem:[#allocation8 + $0x150] sm:$0xff] %v3002
    %3067 = vst [vmem:[#allocation8 + $0x158] sm:$0xff] %v3003
    %3068 = vst [vmem:[#allocation8 + $0x160] sm:$0xff] %v3004
    %3069 = vst [vmem:[#allocation8 + $0x168] sm:$0xff] %v3005
    %3070 = vst [vmem:[#allocation8 + $0x170] sm:$0xff] %v3006
    %3071 = vst [vmem:[#allocation8 + $0x178] sm:$0xff] %v3007
    %3072 = vst [vmem:[#allocation8 + $0x180] sm:$0xff] %v3008
    %3073 = vst [vmem:[#allocation8 + $0x188] sm:$0xff] %v3009
    %3074 = vst [vmem:[#allocation8 + $0x190] sm:$0xff] %v3010
    %3075 = vst [vmem:[#allocation8 + $0x198] sm:$0xff] %v3011
    %3076 = vst [vmem:[#allocation8 + $0x1a0] sm:$0xff] %v3012
    %3077 = vst [vmem:[#allocation8 + $0x1a8] sm:$0xff] %v3013
    %3078 = vst [vmem:[#allocation8 + $0x1b0] sm:$0xff] %v3014
    %3079 = vst [vmem:[#allocation8 + $0x1b8] sm:$0xff] %v3015
    %3080 = vst [vmem:[#allocation8 + $0x1c0] sm:$0xff] %v3016
    %3081 = vst [vmem:[#allocation8 + $0x1c8] sm:$0xff] %v3017
    %3082 = vst [vmem:[#allocation8 + $0x1d0] sm:$0xff] %v3018
    %3083 = vst [vmem:[#allocation8 + $0x1d8] sm:$0xff] %v3019
    %3084 = vst [vmem:[#allocation8 + $0x1e0] sm:$0xff] %v3020
    %3085 = vst [vmem:[#allocation8 + $0x1e8] sm:$0xff] %v3021
    %3086 = vst [vmem:[#allocation8 + $0x1f0] sm:$0xff] %v3022
    %3087 = vst [vmem:[#allocation8 + $0x1f8] sm:$0xff] %v3023
    // Predicated region
    $region26: #{tpu_custom_call.1} parent=1 // pred_check
      _
    $region27: #{tpu_custom_call.1} parent=1 // pred_check_branch
      %3089 = sbr.rel (0) target = $region29
    $region28: #{tpu_custom_call.1} parent=1 // pred_region
      %s3091 = ssub.s32 8192, 8192
      %3092 = vsyncadd [#allocation4], %s3091
      %s3093 = sshll.u32 [#allocation8], 4
      %s3094 = int_to_ptr.vmem [resolvable:$true] %s3093
      %3099 = dma.vmem_to_hbm [thread:$0]  %s3094, 8192, %s3, [#allocation4], 256, 256, 16
    $region29: #{tpu_custom_call.1} parent=1 // pred_fallthru
      _
    // Predicated region
    $region30: #{tpu_custom_call.1} parent=1 // pred_check
      _
    $region31: #{tpu_custom_call.1} parent=1 // pred_check_branch
      %3101 = sbr.rel (0) target = $region33
    $region32: #{tpu_custom_call.1} parent=1 // pred_region
      %3102 = dma.done [#allocation4], 8192
    $region33: #{tpu_custom_call.1} parent=1 // pred_fallthru
      _
    %3103 = vsyncpa [#allocation3], 1
    %3104 = vsyncpa [#allocation6], 1
    %3105 = vsyncpa [#allocation4], 1

</llo_original>
